<compile_context>
chip_gen: v6e
topology: v6e:2x2x1
jax: 0.10.0
libtpu: 0.0.40
codegen_flags: <defaults>
</compile_context>

<pallas_src>
import functools
import re

import jax
import jax.numpy as jnp
from jax import lax
from jax.experimental import pallas as pl
from jax.experimental.pallas import tpu as pltpu


def _round_up(x, m):
    return ((x + m - 1) // m) * m


def _tpu_generation():
    """Best-effort TPU generation number (e.g. 5, 6, 7); 0 if unknown."""
    try:
        kind = jax.devices()[0].device_kind  # e.g. "TPU v5 lite", "TPU v6e", "TPU7x"
        m = re.search(r"(\d+)", kind)
        return int(m.group(1)) if m else 0
    except Exception:
        return 0


def _permute_gate_columns(x):
    """Reorder the last-axis gate blocks from PyTorch's (i, f, g, o) to (i, f, o, g)."""
    i, f, g, o = jnp.split(x, 4, axis=-1)
    return jnp.concatenate([i, f, o, g], axis=-1)


def lstm_classifier_kernel(gx_ref, b_ref, w_hh_ref, w_out_ref, b_out_ref, out_ref,
                           h_sc, c_sc, *, hidden_size, t_blk, seq_len, unroll):
    """One grid step == one (batch block, time block).

    gx_ref    : (T_BLK, B_BLK, 4H) compute_dtype  precomputed x @ W_ih for this time block
    b_ref     : (1, 4H)            f32            combined LSTM gate bias (b_ih + b_hh)
    w_hh_ref  : (H, 4H)            compute_dtype  hidden->gates weight (transposed)
    w_out_ref : (H, O_pad)         compute_dtype  final Linear weight (transposed, padded)
    b_out_ref : (1, O_pad)         f32            final Linear bias (lane-padded)
    out_ref   : (B_BLK, O_pad)     f32            logits, written on the last time block
    h_sc,c_sc : (B_BLK, H)         f32            VMEM scratch carrying state across blocks

    Gate column order is (i, f, o, g): one fused sigmoid over [:, :3H], one tanh on [:, 3H:].
    """
    H = hidden_size
    t_block = pl.program_id(1)
    n_t = pl.num_programs(1)

    @pl.when(t_block == 0)
    def _():
        h_sc[...] = jnp.zeros_like(h_sc)
        c_sc[...] = jnp.zeros_like(c_sc)

    # Hoist weight / bias loads out of the serial time loop.
    w_hh = w_hh_ref[...]
    bias = b_ref[...]

    def make_step(masked):
        def step(t_local, carry):
            h, c = carry
            # Only the recurrent matmul remains in the serial loop (f32 accumulation).
            gates = (gx_ref[t_local].astype(jnp.float32) + bias
                     + jnp.dot(h.astype(w_hh.dtype), w_hh,
                               preferred_element_type=jnp.float32))
            sig = jax.nn.sigmoid(gates[:, :3 * H])      # one EUP pass for i, f, o
            i_g = sig[:, 0 * H:1 * H]
            f_g = sig[:, 1 * H:2 * H]
            o_g = sig[:, 2 * H:3 * H]
            g_g = jnp.tanh(gates[:, 3 * H:4 * H])
            c_new = f_g * c + i_g * g_g
            h_new = o_g * jnp.tanh(c_new)
            if masked:  # only traced for the ragged tail block
                valid = (t_block * t_blk + t_local) < seq_len
                h_new = jnp.where(valid, h_new, h)
                c_new = jnp.where(valid, c_new, c)
            return h_new, c_new
        return step

    def run_block(masked):
        h, c = lax.fori_loop(0, t_blk, make_step(masked), (h_sc[...], c_sc[...]),
                             unroll=unroll)
        # Single store per block for each of h/c (not once per timestep).
        h_sc[...] = h
        c_sc[...] = c

    needs_mask = (seq_len % t_blk) != 0  # static (Python-level) decision
    if needs_mask:
        # Pay the tail-mask selects only in the last time block.
        @pl.when(t_block != n_t - 1)
        def _():
            run_block(False)

        @pl.when(t_block == n_t - 1)
        def _():
            run_block(True)
    else:
        run_block(False)

    @pl.when(t_block == n_t - 1)
    def _():
        h = h_sc[...]
        logits = (jnp.dot(h.astype(w_out_ref.dtype), w_out_ref[...],
                          preferred_element_type=jnp.float32)
                  + b_out_ref[...])
        out_ref[...] = logits.astype(out_ref.dtype)


def _vmem_estimate_bytes(t_blk, b_blk, H, O_pad, cdt_bytes):
    gates = 2 * t_blk * b_blk * 4 * H * cdt_bytes        # double-buffered stream
    weights = 2 * (H * 4 * H * cdt_bytes                 # w_hh
                   + H * O_pad * cdt_bytes               # w_out
                   + 4 * H * 4                           # gate bias (f32)
                   + O_pad * 4)                          # out bias (f32)
    out = 2 * b_blk * O_pad * 4
    scratch = 2 * b_blk * H * 4
    return gates + weights + out + scratch


def lstm_classifier_forward(input_sentence, params, *, t_blk=None, b_blk=None,
                            compute_dtype=jnp.float32, unroll=8,
                            vmem_budget_bytes=None):
    """input_sentence: (batch, seq) int32 token ids -> logits (batch, output_size)."""
    emb = params["embedding"]            # (vocab, E)
    w_ih = params["w_ih"]                # (E, 4H)
    w_hh = params["w_hh"]                # (H, 4H)
    b = params["b"]                      # (1, 4H)  combined b_ih + b_hh
    w_out = params["w_out"]              # (H, O)
    b_out = params["b_out"]              # (1, O)

    B, S = input_sentence.shape
    E = emb.shape[1]
    H = w_hh.shape[0]
    O = w_out.shape[1]

    # -------- generation-aware defaults (megacore batch split, VMEM budget) --------
    gen = _tpu_generation()
    num_tc = 2 if gen >= 7 else 1                    # v7x: 2 TensorCores per chip
    if vmem_budget_bytes is None:
        if gen >= 7:
            vmem_budget_bytes = 48 * 1024 * 1024     # v7x: 64 MiB physical VMEM
        elif gen >= 4:
            vmem_budget_bytes = 100 * 1024 * 1024    # v4/v5e/v6e: 128 MiB physical VMEM
        else:
            vmem_budget_bytes = 32 * 1024 * 1024     # unknown: stay conservative

    # -------- gate-column permutation: (i, f, g, o) -> (i, f, o, g) --------
    w_ih_p = _permute_gate_columns(w_ih)
    w_hh_p = _permute_gate_columns(w_hh).astype(compute_dtype)
    b_p = _permute_gate_columns(b).astype(jnp.float32)

    # -------- XLA glue: embedding gather + hoisted input-side matmul --------
    # Time-major token layout (S, B) avoids transposing the (B, S, E) activation tensor.
    tok_t = input_sentence.T                                     # (S, B)
    x_emb = jnp.take(emb, tok_t, axis=0)                         # (S, B, E)
    gates_x = jnp.dot(x_emb.reshape(S * B, E).astype(compute_dtype),
                      w_ih_p.astype(compute_dtype),
                      preferred_element_type=jnp.float32)
    # Stream the only per-time-block tensor in compute_dtype (bf16 halves HBM traffic);
    # the gate bias is re-added in-kernel in f32.
    gates_x = gates_x.reshape(S, B, 4 * H).astype(compute_dtype)

    # -------- padding / tile sizing --------
    B_pad = _round_up(max(B, 8), 8)          # f32 sublane tile = 8
    O_pad = _round_up(max(O, 128), 128)      # lane-dense final store
    cdt_bytes = jnp.dtype(compute_dtype).itemsize

    if b_blk is None:
        if num_tc >= 2 and B_pad >= 16:
            # >=2 batch tiles so the second TensorCore takes half the recurrence.
            b_blk = _round_up(-(-B_pad // num_tc), 8)
        else:
            b_blk = B_pad                    # single TC: one batch tile, no overhead
    b_blk = _round_up(min(b_blk, B_pad), 8)
    B_pad = _round_up(B_pad, b_blk)

    if t_blk is None:
        # Largest time block (<= 64 steps) whose double-buffered stream fits the budget.
        t_blk = min(64, S)
        while t_blk > 1 and (_vmem_estimate_bytes(t_blk, b_blk, H, O_pad, cdt_bytes)
                             > 0.85 * vmem_budget_bytes):
            t_blk //= 2
    t_blk = max(1, min(t_blk, S))
    S_pad = _round_up(S, t_blk)
    unroll = max(1, min(unroll, t_blk))

    gates_x = jnp.pad(gates_x, ((0, S_pad - S), (0, B_pad - B), (0, 0)))
    w_out_p = jnp.pad(w_out, ((0, 0), (0, O_pad - O))).astype(compute_dtype)
    b_out_p = jnp.pad(b_out, ((0, 0), (0, O_pad - O))).astype(jnp.float32)

    n_b = B_pad // b_blk
    n_t = S_pad // t_blk

    grid_spec = pltpu.PrefetchScalarGridSpec(
        num_scalar_prefetch=0,
        grid=(n_b, n_t),
        in_specs=[
            pl.BlockSpec((t_blk, b_blk, 4 * H), lambda bi, ti: (ti, bi, 0)),  # gates_x
            pl.BlockSpec((1, 4 * H), lambda bi, ti: (0, 0)),                  # gate bias
            pl.BlockSpec((H, 4 * H), lambda bi, ti: (0, 0)),                  # w_hh
            pl.BlockSpec((H, O_pad), lambda bi, ti: (0, 0)),                  # w_out
            pl.BlockSpec((1, O_pad), lambda bi, ti: (0, 0)),                  # b_out
        ],
        out_specs=pl.BlockSpec((b_blk, O_pad), lambda bi, ti: (bi, 0)),
        scratch_shapes=[
            pltpu.VMEM((b_blk, H), jnp.float32),   # h state
            pltpu.VMEM((b_blk, H), jnp.float32),   # c state
        ],
    )

    kernel = functools.partial(lstm_classifier_kernel, hidden_size=H,
                               t_blk=t_blk, seq_len=S, unroll=unroll)

    out_pad = pl.pallas_call(
        kernel,
        out_shape=jax.ShapeDtypeStruct((B_pad, O_pad), jnp.float32),
        grid_spec=grid_spec,
        compiler_params=pltpu.CompilerParams(
            # batch tiles are independent (v7x megacore); time is the serial recurrence
            # and must stay innermost / "arbitrary" for the accumulator output pattern.
            dimension_semantics=("parallel", "arbitrary"),
            vmem_limit_bytes=int(vmem_budget_bytes)),
    )(gates_x, b_p, w_hh_p, w_out_p, b_out_p)

    return out_pad[:B, :O]


def make_params(key, vocab_size, embedding_length, hidden_size, output_size):
    """Deterministic synthetic parameters matching nn.Embedding / nn.LSTM / nn.Linear shapes."""
    ks = jax.random.split(key, 7)
    H, E, O = hidden_size, embedding_length, output_size
    scale = 0.1
    emb = jax.random.normal(ks[0], (vocab_size, E), jnp.float32)
    # PyTorch stores weight_ih_l0 as (4H, E); we keep the transposed layout (E, 4H),
    # gate order (i, f, g, o) as in PyTorch.
    w_ih = scale * jax.random.normal(ks[1], (E, 4 * H), jnp.float32)
    w_hh = scale * jax.random.normal(ks[2], (H, 4 * H), jnp.float32)
    b_ih = scale * jax.random.normal(ks[3], (4 * H,), jnp.float32)
    b_hh = scale * jax.random.normal(ks[4], (4 * H,), jnp.float32)
    w_out = scale * jax.random.normal(ks[5], (H, O), jnp.float32)
    b_out = scale * jax.random.normal(ks[6], (O,), jnp.float32)
    return {
        "embedding": emb,
        "w_ih": w_ih,
        "w_hh": w_hh,
        "b": (b_ih + b_hh).reshape(1, 4 * H),
        "w_out": w_out,
        "b_out": b_out.reshape(1, O),
    }


def reference_forward(input_sentence, params):
    """Pure-JAX reference replicating PyTorch LSTM semantics (gate order i,f,g,o)."""
    emb = params["embedding"]
    x = jnp.take(emb, input_sentence, axis=0)          # (B, S, E)
    x = jnp.transpose(x, (1, 0, 2))                    # (S, B, E)
    B = x.shape[1]
    H = params["w_hh"].shape[0]

    def step(carry, x_t):
        h, c = carry
        gates = x_t @ params["w_ih"] + h @ params["w_hh"] + params["b"]
        i_g = jax.nn.sigmoid(gates[:, 0 * H:1 * H])
        f_g = jax.nn.sigmoid(gates[:, 1 * H:2 * H])
        g_g = jnp.tanh(gates[:, 2 * H:3 * H])
        o_g = jax.nn.sigmoid(gates[:, 3 * H:4 * H])
        c = f_g * c + i_g * g_g
        h = o_g * jnp.tanh(c)
        return (h, c), None

    h0 = jnp.zeros((B, H), jnp.float32)
    c0 = jnp.zeros((B, H), jnp.float32)
    (h_final, _), _ = lax.scan(step, (h0, c0), x)
    return h_final @ params["w_out"] + params["b_out"]


if __name__ == "__main__":
    # Small, forward-consistent sizes.
    batch_size = 2
    seq_len = 8
    vocab_size = 50
    embedding_length = 32
    hidden_size = 32
    output_size = 2

    key = jax.random.PRNGKey(0)
    k_params, k_tokens = jax.random.split(key)
    params = make_params(k_params, vocab_size, embedding_length,
                         hidden_size, output_size)
    input_sentence = jax.random.randint(
        k_tokens, (batch_size, seq_len), 0, vocab_size, dtype=jnp.int32)

    ref = reference_forward(input_sentence, params)

    # f32 streaming: tight numerical check against the PyTorch-semantics reference.
    logits = lstm_classifier_forward(input_sentence, params,
                                     compute_dtype=jnp.float32)
    logits = jax.block_until_ready(logits)
    assert logits.shape == (batch_size, output_size)
    assert jnp.allclose(logits, ref, atol=1e-3, rtol=1e-3), (logits, ref)

    # bf16 streaming / weights (f32 accumulation & f32 h/c state): production setting.
    # Error compounds through the recurrence at long S; keep W_hh f32 if needed.
    logits_bf16 = lstm_classifier_forward(input_sentence, params,
                                          compute_dtype=jnp.bfloat16)
    logits_bf16 = jax.block_until_ready(logits_bf16)
    assert logits_bf16.shape == (batch_size, output_size)
    assert jnp.allclose(logits_bf16, ref, atol=5e-2, rtol=5e-2), (logits_bf16, ref)

    print("KERNEL_OK")
</pallas_src>

<mosaic_0001>
module attributes {stable_mosaic.version = 11 : i64} {
  func.func @lstm_classifier_kernel(%arg0: i32, %arg1: i32, %arg2: memref<8x8x128xf32, #tpu.memory_space<vmem>>, %arg3: memref<1x128xf32, #tpu.memory_space<vmem>>, %arg4: memref<32x128xf32, #tpu.memory_space<vmem>>, %arg5: memref<32x128xf32, #tpu.memory_space<vmem>>, %arg6: memref<1x128xf32, #tpu.memory_space<vmem>>, %arg7: memref<8x128xf32, #tpu.memory_space<vmem>>, %arg8: memref<8x32xf32, #tpu.memory_space<vmem>>, %arg9: memref<8x32xf32, #tpu.memory_space<vmem>>) attributes {dimension_semantics = [#tpu.dimension_semantics<parallel>, #tpu.dimension_semantics<arbitrary>], iteration_bounds = array<i64: 1, 1>, scalar_prefetch = 0 : i64, scratch_operands = 2 : i64, tpu.core_type = #tpu.core_type<tc>, window_params = [{transform_indices = @transform_0, window_bounds = array<i64: 8, 8, 128>}, {pipeline_mode = #tpu.pipeline_mode<synchronous>, transform_indices = @transform_1, window_bounds = array<i64: 1, 128>}, {pipeline_mode = #tpu.pipeline_mode<synchronous>, transform_indices = @transform_2, window_bounds = array<i64: 32, 128>}, {pipeline_mode = #tpu.pipeline_mode<synchronous>, transform_indices = @transform_3, window_bounds = array<i64: 32, 128>}, {pipeline_mode = #tpu.pipeline_mode<synchronous>, transform_indices = @transform_4, window_bounds = array<i64: 1, 128>}, {transform_indices = @transform_5, window_bounds = array<i64: 8, 128>}]} {
    %c0_i32 = arith.constant 0 : i32
    %0 = arith.cmpi eq, %arg1, %c0_i32 : i32
    %1 = arith.extui %0 : i1 to i32
    %c0_i32_0 = arith.constant 0 : i32
    %2 = arith.cmpi ne, %1, %c0_i32_0 : i32
    scf.if %2 {
      %cst_46 = arith.constant 0.000000e+00 : f32
      %196 = vector.broadcast %cst_46 : f32 to vector<8x32xf32>
      %c0_47 = arith.constant 0 : index
      %c0_48 = arith.constant 0 : index
      %197 = vector.load %arg8[%c0_47, %c0_48] : memref<8x32xf32, #tpu.memory_space<vmem>>, vector<8x32xf32>
      tpu.vector_store %arg8[%c0_47, %c0_48], %196 {strides = array<i32>} : memref<8x32xf32, #tpu.memory_space<vmem>>, vector<8x32xf32>,
      %cst_49 = arith.constant 0.000000e+00 : f32
      %198 = vector.broadcast %cst_49 : f32 to vector<8x32xf32>
      %c0_50 = arith.constant 0 : index
      %c0_51 = arith.constant 0 : index
      %199 = vector.load %arg9[%c0_50, %c0_51] : memref<8x32xf32, #tpu.memory_space<vmem>>, vector<8x32xf32>
      tpu.vector_store %arg9[%c0_50, %c0_51], %198 {strides = array<i32>} : memref<8x32xf32, #tpu.memory_space<vmem>>, vector<8x32xf32>,
    } else {
    }
    %c0 = arith.constant 0 : index
    %c0_1 = arith.constant 0 : index
    %3 = vector.load %arg4[%c0, %c0_1] : memref<32x128xf32, #tpu.memory_space<vmem>>, vector<32x128xf32>
    %c0_2 = arith.constant 0 : index
    %c0_3 = arith.constant 0 : index
    %4 = vector.load %arg3[%c0_2, %c0_3] : memref<1x128xf32, #tpu.memory_space<vmem>>, vector<1x128xf32>
    %c0_4 = arith.constant 0 : index
    %c0_5 = arith.constant 0 : index
    %5 = vector.load %arg8[%c0_4, %c0_5] : memref<8x32xf32, #tpu.memory_space<vmem>>, vector<8x32xf32>
    %c0_6 = arith.constant 0 : index
    %c0_7 = arith.constant 0 : index
    %6 = vector.load %arg9[%c0_6, %c0_7] : memref<8x32xf32, #tpu.memory_space<vmem>>, vector<8x32xf32>
    %c0_i32_8 = arith.constant 0 : i32
    %7 = arith.index_cast %c0_i32_8 : i32 to index
    %c0_9 = arith.constant 0 : index
    %c0_10 = arith.constant 0 : index
    %8 = vector.load %arg2[%7, %c0_9, %c0_10] : memref<8x8x128xf32, #tpu.memory_space<vmem>>, vector<1x8x128xf32>
    %9 = vector.shape_cast %8 : vector<1x8x128xf32> to vector<8x128xf32>
    %10 = vector.broadcast %4 : vector<1x128xf32> to vector<8x128xf32>
    %11 = arith.addf %9, %10 : vector<8x128xf32>
    %cst = arith.constant dense<0.000000e+00> : vector<8x128xf32>
    %12 = tpu.matmul %5, %3, %cst {dimension_numbers = #tpu.dot_dimension_numbers<[1], [0], [0], [1], [0, 0, 1, 1], [], []>} : vector<8x32xf32>, vector<32x128xf32>, vector<8x128xf32> -> vector<8x128xf32>
    %13 = arith.addf %11, %12 : vector<8x128xf32>
    %14 = vector.extract_strided_slice %13 {offsets = [0, 0], sizes = [8, 96], strides = [1, 1]} : vector<8x128xf32> to vector<8x96xf32>
    %15 = arith.negf %14 : vector<8x96xf32>
    %16 = math.exp %15 : vector<8x96xf32>
    %cst_11 = arith.constant 1.000000e+00 : f32
    %17 = vector.broadcast %cst_11 : f32 to vector<8x96xf32>
    %18 = arith.addf %17, %16 : vector<8x96xf32>
    %19 = arith.divf %17, %18 : vector<8x96xf32>
    %20 = vector.extract_strided_slice %19 {offsets = [0, 0], sizes = [8, 32], strides = [1, 1]} : vector<8x96xf32> to vector<8x32xf32>
    %21 = vector.extract_strided_slice %19 {offsets = [0, 32], sizes = [8, 32], strides = [1, 1]} : vector<8x96xf32> to vector<8x32xf32>
    %22 = vector.extract_strided_slice %19 {offsets = [0, 64], sizes = [8, 32], strides = [1, 1]} : vector<8x96xf32> to vector<8x32xf32>
    %23 = vector.extract_strided_slice %13 {offsets = [0, 96], sizes = [8, 32], strides = [1, 1]} : vector<8x128xf32> to vector<8x32xf32>
    %24 = math.tanh %23 : vector<8x32xf32>
    %25 = arith.mulf %21, %6 : vector<8x32xf32>
    %26 = arith.mulf %20, %24 : vector<8x32xf32>
    %27 = arith.addf %25, %26 : vector<8x32xf32>
    %28 = math.tanh %27 : vector<8x32xf32>
    %29 = arith.mulf %22, %28 : vector<8x32xf32>
    %c1_i32 = arith.constant 1 : i32
    %30 = arith.index_cast %c1_i32 : i32 to index
    %c0_12 = arith.constant 0 : index
    %c0_13 = arith.constant 0 : index
    %31 = vector.load %arg2[%30, %c0_12, %c0_13] : memref<8x8x128xf32, #tpu.memory_space<vmem>>, vector<1x8x128xf32>
    %32 = vector.shape_cast %31 : vector<1x8x128xf32> to vector<8x128xf32>
    %33 = vector.broadcast %4 : vector<1x128xf32> to vector<8x128xf32>
    %34 = arith.addf %32, %33 : vector<8x128xf32>
    %cst_14 = arith.constant dense<0.000000e+00> : vector<8x128xf32>
    %35 = tpu.matmul %29, %3, %cst_14 {dimension_numbers = #tpu.dot_dimension_numbers<[1], [0], [0], [1], [0, 0, 1, 1], [], []>} : vector<8x32xf32>, vector<32x128xf32>, vector<8x128xf32> -> vector<8x128xf32>
    %36 = arith.addf %34, %35 : vector<8x128xf32>
    %37 = vector.extract_strided_slice %36 {offsets = [0, 0], sizes = [8, 96], strides = [1, 1]} : vector<8x128xf32> to vector<8x96xf32>
    %38 = arith.negf %37 : vector<8x96xf32>
    %39 = math.exp %38 : vector<8x96xf32>
    %cst_15 = arith.constant 1.000000e+00 : f32
    %40 = vector.broadcast %cst_15 : f32 to vector<8x96xf32>
    %41 = arith.addf %40, %39 : vector<8x96xf32>
    %42 = arith.divf %40, %41 : vector<8x96xf32>
    %43 = vector.extract_strided_slice %42 {offsets = [0, 0], sizes = [8, 32], strides = [1, 1]} : vector<8x96xf32> to vector<8x32xf32>
    %44 = vector.extract_strided_slice %42 {offsets = [0, 32], sizes = [8, 32], strides = [1, 1]} : vector<8x96xf32> to vector<8x32xf32>
    %45 = vector.extract_strided_slice %42 {offsets = [0, 64], sizes = [8, 32], strides = [1, 1]} : vector<8x96xf32> to vector<8x32xf32>
    %46 = vector.extract_strided_slice %36 {offsets = [0, 96], sizes = [8, 32], strides = [1, 1]} : vector<8x128xf32> to vector<8x32xf32>
    %47 = math.tanh %46 : vector<8x32xf32>
    %48 = arith.mulf %44, %27 : vector<8x32xf32>
    %49 = arith.mulf %43, %47 : vector<8x32xf32>
    %50 = arith.addf %48, %49 : vector<8x32xf32>
    %51 = math.tanh %50 : vector<8x32xf32>
    %52 = arith.mulf %45, %51 : vector<8x32xf32>
    %c2_i32 = arith.constant 2 : i32
    %53 = arith.index_cast %c2_i32 : i32 to index
    %c0_16 = arith.constant 0 : index
    %c0_17 = arith.constant 0 : index
    %54 = vector.load %arg2[%53, %c0_16, %c0_17] : memref<8x8x128xf32, #tpu.memory_space<vmem>>, vector<1x8x128xf32>
    %55 = vector.shape_cast %54 : vector<1x8x128xf32> to vector<8x128xf32>
    %56 = vector.broadcast %4 : vector<1x128xf32> to vector<8x128xf32>
    %57 = arith.addf %55, %56 : vector<8x128xf32>
    %cst_18 = arith.constant dense<0.000000e+00> : vector<8x128xf32>
    %58 = tpu.matmul %52, %3, %cst_18 {dimension_numbers = #tpu.dot_dimension_numbers<[1], [0], [0], [1], [0, 0, 1, 1], [], []>} : vector<8x32xf32>, vector<32x128xf32>, vector<8x128xf32> -> vector<8x128xf32>
    %59 = arith.addf %57, %58 : vector<8x128xf32>
    %60 = vector.extract_strided_slice %59 {offsets = [0, 0], sizes = [8, 96], strides = [1, 1]} : vector<8x128xf32> to vector<8x96xf32>
    %61 = arith.negf %60 : vector<8x96xf32>
    %62 = math.exp %61 : vector<8x96xf32>
    %cst_19 = arith.constant 1.000000e+00 : f32
    %63 = vector.broadcast %cst_19 : f32 to vector<8x96xf32>
    %64 = arith.addf %63, %62 : vector<8x96xf32>
    %65 = arith.divf %63, %64 : vector<8x96xf32>
    %66 = vector.extract_strided_slice %65 {offsets = [0, 0], sizes = [8, 32], strides = [1, 1]} : vector<8x96xf32> to vector<8x32xf32>
    %67 = vector.extract_strided_slice %65 {offsets = [0, 32], sizes = [8, 32], strides = [1, 1]} : vector<8x96xf32> to vector<8x32xf32>
    %68 = vector.extract_strided_slice %65 {offsets = [0, 64], sizes = [8, 32], strides = [1, 1]} : vector<8x96xf32> to vector<8x32xf32>
    %69 = vector.extract_strided_slice %59 {offsets = [0, 96], sizes = [8, 32], strides = [1, 1]} : vector<8x128xf32> to vector<8x32xf32>
    %70 = math.tanh %69 : vector<8x32xf32>
    %71 = arith.mulf %67, %50 : vector<8x32xf32>
    %72 = arith.mulf %66, %70 : vector<8x32xf32>
    %73 = arith.addf %71, %72 : vector<8x32xf32>
    %74 = math.tanh %73 : vector<8x32xf32>
    %75 = arith.mulf %68, %74 : vector<8x32xf32>
    %c3_i32 = arith.constant 3 : i32
    %76 = arith.index_cast %c3_i32 : i32 to index
    %c0_20 = arith.constant 0 : index
    %c0_21 = arith.constant 0 : index
    %77 = vector.load %arg2[%76, %c0_20, %c0_21] : memref<8x8x128xf32, #tpu.memory_space<vmem>>, vector<1x8x128xf32>
    %78 = vector.shape_cast %77 : vector<1x8x128xf32> to vector<8x128xf32>
    %79 = vector.broadcast %4 : vector<1x128xf32> to vector<8x128xf32>
    %80 = arith.addf %78, %79 : vector<8x128xf32>
    %cst_22 = arith.constant dense<0.000000e+00> : vector<8x128xf32>
    %81 = tpu.matmul %75, %3, %cst_22 {dimension_numbers = #tpu.dot_dimension_numbers<[1], [0], [0], [1], [0, 0, 1, 1], [], []>} : vector<8x32xf32>, vector<32x128xf32>, vector<8x128xf32> -> vector<8x128xf32>
    %82 = arith.addf %80, %81 : vector<8x128xf32>
    %83 = vector.extract_strided_slice %82 {offsets = [0, 0], sizes = [8, 96], strides = [1, 1]} : vector<8x128xf32> to vector<8x96xf32>
    %84 = arith.negf %83 : vector<8x96xf32>
    %85 = math.exp %84 : vector<8x96xf32>
    %cst_23 = arith.constant 1.000000e+00 : f32
    %86 = vector.broadcast %cst_23 : f32 to vector<8x96xf32>
    %87 = arith.addf %86, %85 : vector<8x96xf32>
    %88 = arith.divf %86, %87 : vector<8x96xf32>
    %89 = vector.extract_strided_slice %88 {offsets = [0, 0], sizes = [8, 32], strides = [1, 1]} : vector<8x96xf32> to vector<8x32xf32>
    %90 = vector.extract_strided_slice %88 {offsets = [0, 32], sizes = [8, 32], strides = [1, 1]} : vector<8x96xf32> to vector<8x32xf32>
    %91 = vector.extract_strided_slice %88 {offsets = [0, 64], sizes = [8, 32], strides = [1, 1]} : vector<8x96xf32> to vector<8x32xf32>
    %92 = vector.extract_strided_slice %82 {offsets = [0, 96], sizes = [8, 32], strides = [1, 1]} : vector<8x128xf32> to vector<8x32xf32>
    %93 = math.tanh %92 : vector<8x32xf32>
    %94 = arith.mulf %90, %73 : vector<8x32xf32>
    %95 = arith.mulf %89, %93 : vector<8x32xf32>
    %96 = arith.addf %94, %95 : vector<8x32xf32>
    %97 = math.tanh %96 : vector<8x32xf32>
    %98 = arith.mulf %91, %97 : vector<8x32xf32>
    %c4_i32 = arith.constant 4 : i32
    %99 = arith.index_cast %c4_i32 : i32 to index
    %c0_24 = arith.constant 0 : index
    %c0_25 = arith.constant 0 : index
    %100 = vector.load %arg2[%99, %c0_24, %c0_25] : memref<8x8x128xf32, #tpu.memory_space<vmem>>, vector<1x8x128xf32>
    %101 = vector.shape_cast %100 : vector<1x8x128xf32> to vector<8x128xf32>
    %102 = vector.broadcast %4 : vector<1x128xf32> to vector<8x128xf32>
    %103 = arith.addf %101, %102 : vector<8x128xf32>
    %cst_26 = arith.constant dense<0.000000e+00> : vector<8x128xf32>
    %104 = tpu.matmul %98, %3, %cst_26 {dimension_numbers = #tpu.dot_dimension_numbers<[1], [0], [0], [1], [0, 0, 1, 1], [], []>} : vector<8x32xf32>, vector<32x128xf32>, vector<8x128xf32> -> vector<8x128xf32>
    %105 = arith.addf %103, %104 : vector<8x128xf32>
    %106 = vector.extract_strided_slice %105 {offsets = [0, 0], sizes = [8, 96], strides = [1, 1]} : vector<8x128xf32> to vector<8x96xf32>
    %107 = arith.negf %106 : vector<8x96xf32>
    %108 = math.exp %107 : vector<8x96xf32>
    %cst_27 = arith.constant 1.000000e+00 : f32
    %109 = vector.broadcast %cst_27 : f32 to vector<8x96xf32>
    %110 = arith.addf %109, %108 : vector<8x96xf32>
    %111 = arith.divf %109, %110 : vector<8x96xf32>
    %112 = vector.extract_strided_slice %111 {offsets = [0, 0], sizes = [8, 32], strides = [1, 1]} : vector<8x96xf32> to vector<8x32xf32>
    %113 = vector.extract_strided_slice %111 {offsets = [0, 32], sizes = [8, 32], strides = [1, 1]} : vector<8x96xf32> to vector<8x32xf32>
    %114 = vector.extract_strided_slice %111 {offsets = [0, 64], sizes = [8, 32], strides = [1, 1]} : vector<8x96xf32> to vector<8x32xf32>
    %115 = vector.extract_strided_slice %105 {offsets = [0, 96], sizes = [8, 32], strides = [1, 1]} : vector<8x128xf32> to vector<8x32xf32>
    %116 = math.tanh %115 : vector<8x32xf32>
    %117 = arith.mulf %113, %96 : vector<8x32xf32>
    %118 = arith.mulf %112, %116 : vector<8x32xf32>
    %119 = arith.addf %117, %118 : vector<8x32xf32>
    %120 = math.tanh %119 : vector<8x32xf32>
    %121 = arith.mulf %114, %120 : vector<8x32xf32>
    %c5_i32 = arith.constant 5 : i32
    %122 = arith.index_cast %c5_i32 : i32 to index
    %c0_28 = arith.constant 0 : index
    %c0_29 = arith.constant 0 : index
    %123 = vector.load %arg2[%122, %c0_28, %c0_29] : memref<8x8x128xf32, #tpu.memory_space<vmem>>, vector<1x8x128xf32>
    %124 = vector.shape_cast %123 : vector<1x8x128xf32> to vector<8x128xf32>
    %125 = vector.broadcast %4 : vector<1x128xf32> to vector<8x128xf32>
    %126 = arith.addf %124, %125 : vector<8x128xf32>
    %cst_30 = arith.constant dense<0.000000e+00> : vector<8x128xf32>
    %127 = tpu.matmul %121, %3, %cst_30 {dimension_numbers = #tpu.dot_dimension_numbers<[1], [0], [0], [1], [0, 0, 1, 1], [], []>} : vector<8x32xf32>, vector<32x128xf32>, vector<8x128xf32> -> vector<8x128xf32>
    %128 = arith.addf %126, %127 : vector<8x128xf32>
    %129 = vector.extract_strided_slice %128 {offsets = [0, 0], sizes = [8, 96], strides = [1, 1]} : vector<8x128xf32> to vector<8x96xf32>
    %130 = arith.negf %129 : vector<8x96xf32>
    %131 = math.exp %130 : vector<8x96xf32>
    %cst_31 = arith.constant 1.000000e+00 : f32
    %132 = vector.broadcast %cst_31 : f32 to vector<8x96xf32>
    %133 = arith.addf %132, %131 : vector<8x96xf32>
    %134 = arith.divf %132, %133 : vector<8x96xf32>
    %135 = vector.extract_strided_slice %134 {offsets = [0, 0], sizes = [8, 32], strides = [1, 1]} : vector<8x96xf32> to vector<8x32xf32>
    %136 = vector.extract_strided_slice %134 {offsets = [0, 32], sizes = [8, 32], strides = [1, 1]} : vector<8x96xf32> to vector<8x32xf32>
    %137 = vector.extract_strided_slice %134 {offsets = [0, 64], sizes = [8, 32], strides = [1, 1]} : vector<8x96xf32> to vector<8x32xf32>
    %138 = vector.extract_strided_slice %128 {offsets = [0, 96], sizes = [8, 32], strides = [1, 1]} : vector<8x128xf32> to vector<8x32xf32>
    %139 = math.tanh %138 : vector<8x32xf32>
    %140 = arith.mulf %136, %119 : vector<8x32xf32>
    %141 = arith.mulf %135, %139 : vector<8x32xf32>
    %142 = arith.addf %140, %141 : vector<8x32xf32>
    %143 = math.tanh %142 : vector<8x32xf32>
    %144 = arith.mulf %137, %143 : vector<8x32xf32>
    %c6_i32 = arith.constant 6 : i32
    %145 = arith.index_cast %c6_i32 : i32 to index
    %c0_32 = arith.constant 0 : index
    %c0_33 = arith.constant 0 : index
    %146 = vector.load %arg2[%145, %c0_32, %c0_33] : memref<8x8x128xf32, #tpu.memory_space<vmem>>, vector<1x8x128xf32>
    %147 = vector.shape_cast %146 : vector<1x8x128xf32> to vector<8x128xf32>
    %148 = vector.broadcast %4 : vector<1x128xf32> to vector<8x128xf32>
    %149 = arith.addf %147, %148 : vector<8x128xf32>
    %cst_34 = arith.constant dense<0.000000e+00> : vector<8x128xf32>
    %150 = tpu.matmul %144, %3, %cst_34 {dimension_numbers = #tpu.dot_dimension_numbers<[1], [0], [0], [1], [0, 0, 1, 1], [], []>} : vector<8x32xf32>, vector<32x128xf32>, vector<8x128xf32> -> vector<8x128xf32>
    %151 = arith.addf %149, %150 : vector<8x128xf32>
    %152 = vector.extract_strided_slice %151 {offsets = [0, 0], sizes = [8, 96], strides = [1, 1]} : vector<8x128xf32> to vector<8x96xf32>
    %153 = arith.negf %152 : vector<8x96xf32>
    %154 = math.exp %153 : vector<8x96xf32>
    %cst_35 = arith.constant 1.000000e+00 : f32
    %155 = vector.broadcast %cst_35 : f32 to vector<8x96xf32>
    %156 = arith.addf %155, %154 : vector<8x96xf32>
    %157 = arith.divf %155, %156 : vector<8x96xf32>
    %158 = vector.extract_strided_slice %157 {offsets = [0, 0], sizes = [8, 32], strides = [1, 1]} : vector<8x96xf32> to vector<8x32xf32>
    %159 = vector.extract_strided_slice %157 {offsets = [0, 32], sizes = [8, 32], strides = [1, 1]} : vector<8x96xf32> to vector<8x32xf32>
    %160 = vector.extract_strided_slice %157 {offsets = [0, 64], sizes = [8, 32], strides = [1, 1]} : vector<8x96xf32> to vector<8x32xf32>
    %161 = vector.extract_strided_slice %151 {offsets = [0, 96], sizes = [8, 32], strides = [1, 1]} : vector<8x128xf32> to vector<8x32xf32>
    %162 = math.tanh %161 : vector<8x32xf32>
    %163 = arith.mulf %159, %142 : vector<8x32xf32>
    %164 = arith.mulf %158, %162 : vector<8x32xf32>
    %165 = arith.addf %163, %164 : vector<8x32xf32>
    %166 = math.tanh %165 : vector<8x32xf32>
    %167 = arith.mulf %160, %166 : vector<8x32xf32>
    %c7_i32 = arith.constant 7 : i32
    %168 = arith.index_cast %c7_i32 : i32 to index
    %c0_36 = arith.constant 0 : index
    %c0_37 = arith.constant 0 : index
    %169 = vector.load %arg2[%168, %c0_36, %c0_37] : memref<8x8x128xf32, #tpu.memory_space<vmem>>, vector<1x8x128xf32>
    %170 = vector.shape_cast %169 : vector<1x8x128xf32> to vector<8x128xf32>
    %171 = vector.broadcast %4 : vector<1x128xf32> to vector<8x128xf32>
    %172 = arith.addf %170, %171 : vector<8x128xf32>
    %cst_38 = arith.constant dense<0.000000e+00> : vector<8x128xf32>
    %173 = tpu.matmul %167, %3, %cst_38 {dimension_numbers = #tpu.dot_dimension_numbers<[1], [0], [0], [1], [0, 0, 1, 1], [], []>} : vector<8x32xf32>, vector<32x128xf32>, vector<8x128xf32> -> vector<8x128xf32>
    %174 = arith.addf %172, %173 : vector<8x128xf32>
    %175 = vector.extract_strided_slice %174 {offsets = [0, 0], sizes = [8, 96], strides = [1, 1]} : vector<8x128xf32> to vector<8x96xf32>
    %176 = arith.negf %175 : vector<8x96xf32>
    %177 = math.exp %176 : vector<8x96xf32>
    %cst_39 = arith.constant 1.000000e+00 : f32
    %178 = vector.broadcast %cst_39 : f32 to vector<8x96xf32>
    %179 = arith.addf %178, %177 : vector<8x96xf32>
    %180 = arith.divf %178, %179 : vector<8x96xf32>
    %181 = vector.extract_strided_slice %180 {offsets = [0, 0], sizes = [8, 32], strides = [1, 1]} : vector<8x96xf32> to vector<8x32xf32>
    %182 = vector.extract_strided_slice %180 {offsets = [0, 32], sizes = [8, 32], strides = [1, 1]} : vector<8x96xf32> to vector<8x32xf32>
    %183 = vector.extract_strided_slice %180 {offsets = [0, 64], sizes = [8, 32], strides = [1, 1]} : vector<8x96xf32> to vector<8x32xf32>
    %184 = vector.extract_strided_slice %174 {offsets = [0, 96], sizes = [8, 32], strides = [1, 1]} : vector<8x128xf32> to vector<8x32xf32>
    %185 = math.tanh %184 : vector<8x32xf32>
    %186 = arith.mulf %182, %165 : vector<8x32xf32>
    %187 = arith.mulf %181, %185 : vector<8x32xf32>
    %188 = arith.addf %186, %187 : vector<8x32xf32>
    %189 = math.tanh %188 : vector<8x32xf32>
    %190 = arith.mulf %183, %189 : vector<8x32xf32>
    %c8_i32 = arith.constant 8 : i32
    %c0_40 = arith.constant 0 : index
    %c0_41 = arith.constant 0 : index
    %191 = vector.load %arg8[%c0_40, %c0_41] : memref<8x32xf32, #tpu.memory_space<vmem>>, vector<8x32xf32>
    tpu.vector_store %arg8[%c0_40, %c0_41], %190 {strides = array<i32>} : memref<8x32xf32, #tpu.memory_space<vmem>>, vector<8x32xf32>,
    %c0_42 = arith.constant 0 : index
    %c0_43 = arith.constant 0 : index
    %192 = vector.load %arg9[%c0_42, %c0_43] : memref<8x32xf32, #tpu.memory_space<vmem>>, vector<8x32xf32>
    tpu.vector_store %arg9[%c0_42, %c0_43], %188 {strides = array<i32>} : memref<8x32xf32, #tpu.memory_space<vmem>>, vector<8x32xf32>,
    %c0_i32_44 = arith.constant 0 : i32
    %193 = arith.cmpi eq, %arg1, %c0_i32_44 : i32
    %194 = arith.extui %193 : i1 to i32
    %c0_i32_45 = arith.constant 0 : i32
    %195 = arith.cmpi ne, %194, %c0_i32_45 : i32
    scf.if %195 {
      %c0_46 = arith.constant 0 : index
      %c0_47 = arith.constant 0 : index
      %196 = vector.load %arg8[%c0_46, %c0_47] : memref<8x32xf32, #tpu.memory_space<vmem>>, vector<8x32xf32>
      %c0_48 = arith.constant 0 : index
      %c0_49 = arith.constant 0 : index
      %197 = vector.load %arg5[%c0_48, %c0_49] : memref<32x128xf32, #tpu.memory_space<vmem>>, vector<32x128xf32>
      %cst_50 = arith.constant dense<0.000000e+00> : vector<8x128xf32>
      %198 = tpu.matmul %196, %197, %cst_50 {dimension_numbers = #tpu.dot_dimension_numbers<[1], [0], [0], [1], [0, 0, 1, 1], [], []>} : vector<8x32xf32>, vector<32x128xf32>, vector<8x128xf32> -> vector<8x128xf32>
      %c0_51 = arith.constant 0 : index
      %c0_52 = arith.constant 0 : index
      %199 = vector.load %arg6[%c0_51, %c0_52] : memref<1x128xf32, #tpu.memory_space<vmem>>, vector<1x128xf32>
      %200 = vector.broadcast %199 : vector<1x128xf32> to vector<8x128xf32>
      %201 = arith.addf %198, %200 : vector<8x128xf32>
      %c0_53 = arith.constant 0 : index
      %c0_54 = arith.constant 0 : index
      %202 = vector.load %arg7[%c0_53, %c0_54] : memref<8x128xf32, #tpu.memory_space<vmem>>, vector<8x128xf32>
      tpu.vector_store %arg7[%c0_53, %c0_54], %201 {strides = array<i32>} : memref<8x128xf32, #tpu.memory_space<vmem>>, vector<8x128xf32>,
    } else {
    }
    return
  }
  func.func @transform_0(%arg0: i32, %arg1: i32) -> (i32, i32, i32) {
    %c0_i32 = arith.constant 0 : i32
    %c0_i32_0 = arith.constant 0 : i32
    return %arg1, %arg0, %c0_i32 : i32, i32, i32
  }
  func.func @transform_1(%arg0: i32, %arg1: i32) -> (i32, i32) {
    %c0_i32 = arith.constant 0 : i32
    %c0_i32_0 = arith.constant 0 : i32
    %c0_i32_1 = arith.constant 0 : i32
    return %c0_i32, %c0_i32_0 : i32, i32
  }
  func.func @transform_2(%arg0: i32, %arg1: i32) -> (i32, i32) {
    %c0_i32 = arith.constant 0 : i32
    %c0_i32_0 = arith.constant 0 : i32
    %c0_i32_1 = arith.constant 0 : i32
    return %c0_i32, %c0_i32_0 : i32, i32
  }
  func.func @transform_3(%arg0: i32, %arg1: i32) -> (i32, i32) {
    %c0_i32 = arith.constant 0 : i32
    %c0_i32_0 = arith.constant 0 : i32
    %c0_i32_1 = arith.constant 0 : i32
    return %c0_i32, %c0_i32_0 : i32, i32
  }
  func.func @transform_4(%arg0: i32, %arg1: i32) -> (i32, i32) {
    %c0_i32 = arith.constant 0 : i32
    %c0_i32_0 = arith.constant 0 : i32
    %c0_i32_1 = arith.constant 0 : i32
    return %c0_i32, %c0_i32_0 : i32, i32
  }
  func.func @transform_5(%arg0: i32, %arg1: i32) -> (i32, i32) {
    %c0_i32 = arith.constant 0 : i32
    %c0_i32_0 = arith.constant 0 : i32
    return %arg0, %c0_i32 : i32, i32
  }
}

</mosaic_0001>

<llo_original>
// kernel: tpu_custom_call.1
$region0: #{tpu_custom_call.1}
  #allocation0 [shape = 'u32[]', space=smem, size = 0x4, offset = 0x4, fixed_abs, tag = 'smem constant byte address 0x4 - core index']
  #allocation1 [shape = 'u32[144,128]{1,0:T(1,128)}', space=vmem, size = 0x12000, scoped, tag = 'internal scratch']
  #allocation2 [shape = 'f32[8,32]{1,0:T(8,128)}', space=vmem, size = 0x1000, scoped, tag = 'scratch operand']
  #allocation3 [shape = 'f32[8,32]{1,0:T(8,128)}', space=vmem, size = 0x1000, scoped, tag = 'scratch operand']
  %s0 = inlined_call_operand.hbm [shape: f32[8,8,128], index: 0, kind: input, shape index: {}]
  %s1 = inlined_call_operand.vmem [shape: f32[1,128], index: 1, kind: input, shape index: {}]
  %s2 = inlined_call_operand.hbm [shape: f32[32,128], index: 2, kind: input, shape index: {}]
  %s3 = inlined_call_operand.hbm [shape: f32[32,128], index: 3, kind: input, shape index: {}]
  %s4 = inlined_call_operand.vmem [shape: f32[1,128], index: 4, kind: input, shape index: {}]
  %s5 = inlined_call_operand.hbm [shape: f32[8,128], index: 5, kind: output, shape index: {}]
  %s6 = sld [smem:[#allocation0]]
  $region50: #{tpu_custom_call.1} parent=0
    _
  %s8 = ssub.s32 1, %s6
  %s9 = scalar_select 0, %s8, %s6
  $region1: #{tpu_custom_call.1} parent=0
    #allocation4 [shape = 'u8[32768]{0}', space=vmem, size = 0x8000, scoped, tag = 'input window, operand 0, single buffered']
    #allocation5 [shape = 's32[1]{0}', space=sflag, size = 0x4, scoped, tag = 'scoped memory for tpu_custom_call.1']
    #allocation6 [shape = 's32[1]{0}', space=sflag, size = 0x4, scoped, tag = 'scoped memory for tpu_custom_call.1']
    #allocation7 [shape = 'u8[16384]{0}', space=vmem, size = 0x4000, scoped, tag = 'input window, operand 2, single buffered']
    #allocation8 [shape = 's32[1]{0}', space=sflag, size = 0x4, scoped, tag = 'scoped memory for tpu_custom_call.1']
    #allocation9 [shape = 'u8[16384]{0}', space=vmem, size = 0x4000, scoped, tag = 'input window, operand 3, single buffered']
    #allocation10 [shape = 'u8[4096]{0}', space=vmem, size = 0x1000, scoped, tag = 'output window, operand 0, single buffered']
    %10 = vsyncpa [#allocation5], 0
    %11 = vsyncpa [#allocation8], 0
    %12 = vsyncpa [#allocation6], 0
    // Predicated region
    $region2: #{tpu_custom_call.1} parent=1 // pred_check
      _
    $region3: #{tpu_custom_call.1} parent=1 // pred_check_branch
      %14 = sbr.rel (0) target = $region5
    $region4: #{tpu_custom_call.1} parent=1 // pred_region
      %s16 = ssub.s32 1024, 1024
      %17 = vsyncadd [#allocation5], %s16
      %s18 = sshll.u32 [#allocation4], 4
      %s19 = int_to_ptr.vmem [resolvable:$true] %s18
      %24 = dma.hbm_to_vmem [thread:$0]  %s0, 1024, %s19, [#allocation5], 128, 128, 8
    $region5: #{tpu_custom_call.1} parent=1 // pred_fallthru
      _
    // Predicated region
    $region6: #{tpu_custom_call.1} parent=1 // pred_check
      _
    $region7: #{tpu_custom_call.1} parent=1 // pred_check_branch
      %26 = sbr.rel (0) target = $region9
    $region8: #{tpu_custom_call.1} parent=1 // pred_region
      _
    $region9: #{tpu_custom_call.1} parent=1 // pred_fallthru
      _
    // Predicated region
    $region10: #{tpu_custom_call.1} parent=1 // pred_check
      _
    $region11: #{tpu_custom_call.1} parent=1 // pred_check_branch
      %28 = sbr.rel (0) target = $region13
    $region12: #{tpu_custom_call.1} parent=1 // pred_region
      %s30 = ssub.s32 512, 512
      %31 = vsyncadd [#allocation8], %s30
      %s32 = sshll.u32 [#allocation7], 4
      %s33 = int_to_ptr.vmem [resolvable:$true] %s32
      %38 = dma.hbm_to_vmem [thread:$0]  %s2, 512, %s33, [#allocation8], 128, 128, 8
    $region13: #{tpu_custom_call.1} parent=1 // pred_fallthru
      _
    // Predicated region
    $region14: #{tpu_custom_call.1} parent=1 // pred_check
      _
    $region15: #{tpu_custom_call.1} parent=1 // pred_check_branch
      %40 = sbr.rel (0) target = $region17
    $region16: #{tpu_custom_call.1} parent=1 // pred_region
      %s42 = ssub.s32 512, 512
      %43 = vsyncadd [#allocation8], %s42
      %s44 = sshll.u32 [#allocation9], 4
      %s45 = int_to_ptr.vmem [resolvable:$true] %s44
      %50 = dma.hbm_to_vmem [thread:$0]  %s3, 512, %s45, [#allocation8], 128, 128, 8
    $region17: #{tpu_custom_call.1} parent=1 // pred_fallthru
      _
    // Predicated region
    $region18: #{tpu_custom_call.1} parent=1 // pred_check
      _
    $region19: #{tpu_custom_call.1} parent=1 // pred_check_branch
      %52 = sbr.rel (0) target = $region21
    $region20: #{tpu_custom_call.1} parent=1 // pred_region
      _
    $region21: #{tpu_custom_call.1} parent=1 // pred_fallthru
      _
    // Predicated region
    $region22: #{tpu_custom_call.1} parent=1 // pred_check
      _
    $region23: #{tpu_custom_call.1} parent=1 // pred_check_branch
      %54 = sbr.rel (0) target = $region25
    $region24: #{tpu_custom_call.1} parent=1 // pred_region
      %55 = dma.done [#allocation5], 1024
    $region25: #{tpu_custom_call.1} parent=1 // pred_fallthru
      _
    // Predicated region
    $region26: #{tpu_custom_call.1} parent=1 // pred_check
      _
    $region27: #{tpu_custom_call.1} parent=1 // pred_check_branch
      %57 = sbr.rel (0) target = $region29
    $region28: #{tpu_custom_call.1} parent=1 // pred_region
      %58 = dma.done [#allocation8], 512
    $region29: #{tpu_custom_call.1} parent=1 // pred_fallthru
      _
    // Predicated region
    $region30: #{tpu_custom_call.1} parent=1 // pred_check
      _
    $region31: #{tpu_custom_call.1} parent=1 // pred_check_branch
      %60 = sbr.rel (0) target = $region33
    $region32: #{tpu_custom_call.1} parent=1 // pred_region
      %61 = dma.done [#allocation8], 512
    $region33: #{tpu_custom_call.1} parent=1 // pred_fallthru
      _
    %p62 = scmp.eq.s32.totalorder 0, 0
    // Predicated region
    $region34: #{tpu_custom_call.1} parent=1 // pred_check
      %p63 = pneg %p62
    $region35: #{tpu_custom_call.1} parent=1 // pred_check_branch
      %65 = sbr.rel (%p63) target = $region37
    $region36: #{tpu_custom_call.1} parent=1 // pred_region
      %vm66 = vcmask 261120
      %67 = vst.msk [vmem:[#allocation2] sm:$0xff] %vm66, 0.0
      %68 = vst.msk [vmem:[#allocation3] sm:$0xff] %vm66, 0.0
    $region37: #{tpu_custom_call.1} parent=1 // pred_fallthru
      _
    %v69 = vld [vmem:[#allocation7] sm:$0xff]
    %v70 = vld [vmem:[#allocation7 + $0x8] sm:$0xff]
    %v71 = vld [vmem:[#allocation7 + $0x10] sm:$0xff]
    %v72 = vld [vmem:[#allocation7 + $0x18] sm:$0xff]
    %v73 = vld [vmem:[%s1] sm:$0x1]
    %v74 = vld [vmem:[#allocation2] sm:$0xff]
    %v75 = vld [vmem:[#allocation3] sm:$0xff]
    %v76 = vld [vmem:[#allocation4] sm:$0xff]
    %v78 = vlaneseq
    %v79 = vshrl.u32 %v78, 7
    %v80 = vsub.s32 0, %v79
    %v81 = vrot.slane %v73, %v80
    %v83 = vadd.f32 %v76, %v81
    %vm84 = vcmask 261120
    %v86 = vsel %vm84, %v74, 0
    %88 = vmatprep.subr.mxu0 0.0
    %89 = vmatpush1.msra.mxu0 0.0
    %90 = vmatprep.subr.mxu0 0.0
    %91 = vmatpush1.msra.mxu0 0.0
    %92 = vmatprep.subr.mxu0 0.0
    %93 = vmatpush1.msra.mxu0 0.0
    %94 = vmatprep.subr.mxu0 0.0
    %95 = vmatpush1.msra.mxu0 0.0
    %96 = vmatprep.subr.mxu0 0.0
    %97 = vmatpush1.msra.mxu0 0.0
    %98 = vmatprep.subr.mxu0 0.0
    %99 = vmatpush1.msra.mxu0 0.0
    %100 = vmatprep.subr.mxu0 0.0
    %101 = vmatpush1.msra.mxu0 0.0
    %102 = vmatprep.subr.mxu0 0.0
    %103 = vmatpush1.msra.mxu0 0.0
    %104 = vmatprep.subr.mxu0 0.0
    %105 = vmatpush1.msra.mxu0 0.0
    %106 = vmatprep.subr.mxu0 0.0
    %107 = vmatpush1.msra.mxu0 0.0
    %108 = vmatprep.subr.mxu0 0.0
    %109 = vmatpush1.msra.mxu0 0.0
    %110 = vmatprep.subr.mxu0 0.0
    %111 = vmatpush1.msra.mxu0 0.0
    %112 = vmatprep.subr.mxu0 0.0
    %113 = vmatpush1.msra.mxu0 %v72
    %114 = vmatprep.subr.mxu0 0.0
    %115 = vmatpush1.msra.mxu0 %v71
    %116 = vmatprep.subr.mxu0 0.0
    %117 = vmatpush1.msra.mxu0 %v70
    %118 = vmatprep.subr.mxu0 0.0
    %119 = vmatpush1.msra.mxu0 %v69
    %120 = vmatprep.subr.mxu0 0.0
    %121 = vmatpush2.msra.mxu0 0.0
    %122 = vmatprep.subr.mxu0 0.0
    %123 = vmatpush2.msra.mxu0 0.0
    %124 = vmatprep.subr.mxu0 0.0
    %125 = vmatpush2.msra.mxu0 0.0
    %126 = vmatprep.subr.mxu0 0.0
    %127 = vmatpush2.msra.mxu0 0.0
    %128 = vmatprep.subr.mxu0 0.0
    %129 = vmatpush2.msra.mxu0 0.0
    %130 = vmatprep.subr.mxu0 0.0
    %131 = vmatpush2.msra.mxu0 0.0
    %132 = vmatprep.subr.mxu0 0.0
    %133 = vmatpush2.msra.mxu0 0.0
    %134 = vmatprep.subr.mxu0 0.0
    %135 = vmatpush2.msra.mxu0 0.0
    %136 = vmatprep.subr.mxu0 0.0
    %137 = vmatpush2.msra.mxu0 0.0
    %138 = vmatprep.subr.mxu0 0.0
    %139 = vmatpush2.msra.mxu0 0.0
    %140 = vmatprep.subr.mxu0 0.0
    %141 = vmatpush2.msra.mxu0 0.0
    %142 = vmatprep.subr.mxu0 0.0
    %143 = vmatpush2.msra.mxu0 0.0
    %144 = vmatprep.subr.mxu0 0.0
    %145 = vmatpush2.msra.mxu0 0.0
    %146 = vmatprep.subr.mxu0 0.0
    %147 = vmatpush2.msra.mxu0 0.0
    %148 = vmatprep.subr.mxu0 0.0
    %149 = vmatpush2.msra.mxu0 0.0
    %150 = vmatprep.subr.mxu0 0.0
    %151 = vmatpush2.msra.mxu0 0.0
    %152 = vmatprep.mubr.f32.mxu0 0.0
    %153 = vmatmul.mubr.f32.gmra.mxu0 %v86
    %v154 = vpop.f32.mrf.mxu0
    %v155 = vadd.f32 0.0, %v154
    %v156 = vpop.f32.mrf.mxu0
    %157 = vdwg.mxu0
    %v158 = vadd.f32 %v83, %v155
    %v159 = vxor.u32 %v158, 2147483648
    %v160 = vmul.f32 %v159, 1.442695
    %v161 = vpow.pop %v160
    %v162 = vadd.f32 %v161, 1.0
    %v163 = vrcp.pop %v162
    %v164 = vmul.f32 1.0, %v163
    %v165 = vtanh.pop %v158
    %167 = vrot.lane.b32.xlu0 %v75, 32
    %v168 = vpop.permute.xlu0 %167
    %v170 = vmul.f32 %v164, %v168
    %172 = vrot.lane.b32.xlu0 %v165, 32
    %v173 = vpop.permute.xlu0 %172
    %v175 = vmul.f32 %v164, %v173
    %177 = vrot.lane.b32.xlu0 %v175, 32
    %v178 = vpop.permute.xlu0 %177
    %v180 = vadd.f32 %v170, %v178
    %v181 = vtanh.pop %v180
    %183 = vrot.lane.b32.xlu0 %v181, 32
    %v184 = vpop.permute.xlu0 %183
    %v186 = vmul.f32 %v164, %v184
    %s187 = scalar_lea.vmem [#allocation4], 8
    %v188 = vld [vmem:[%s187] sm:$0xff]
    %v189 = vadd.f32 %v188, %v81
    %191 = vrot.lane.b32.xlu0 %v186, 64
    %v192 = vpop.permute.xlu0 %191
    %v193 = vsel %vm84, %v192, 0
    %195 = vmatprep.subr.mxu0 0.0
    %196 = vmatpush1.msra.mxu0 0.0
    %197 = vmatprep.subr.mxu0 0.0
    %198 = vmatpush1.msra.mxu0 0.0
    %199 = vmatprep.subr.mxu0 0.0
    %200 = vmatpush1.msra.mxu0 0.0
    %201 = vmatprep.subr.mxu0 0.0
    %202 = vmatpush1.msra.mxu0 0.0
    %203 = vmatprep.subr.mxu0 0.0
    %204 = vmatpush1.msra.mxu0 0.0
    %205 = vmatprep.subr.mxu0 0.0
    %206 = vmatpush1.msra.mxu0 0.0
    %207 = vmatprep.subr.mxu0 0.0
    %208 = vmatpush1.msra.mxu0 0.0
    %209 = vmatprep.subr.mxu0 0.0
    %210 = vmatpush1.msra.mxu0 0.0
    %211 = vmatprep.subr.mxu0 0.0
    %212 = vmatpush1.msra.mxu0 0.0
    %213 = vmatprep.subr.mxu0 0.0
    %214 = vmatpush1.msra.mxu0 0.0
    %215 = vmatprep.subr.mxu0 0.0
    %216 = vmatpush1.msra.mxu0 0.0
    %217 = vmatprep.subr.mxu0 0.0
    %218 = vmatpush1.msra.mxu0 0.0
    %219 = vmatprep.subr.mxu0 0.0
    %220 = vmatpush1.msra.mxu0 %v72
    %221 = vmatprep.subr.mxu0 0.0
    %222 = vmatpush1.msra.mxu0 %v71
    %223 = vmatprep.subr.mxu0 0.0
    %224 = vmatpush1.msra.mxu0 %v70
    %225 = vmatprep.subr.mxu0 0.0
    %226 = vmatpush1.msra.mxu0 %v69
    %227 = vmatprep.subr.mxu0 0.0
    %228 = vmatpush2.msra.mxu0 0.0
    %229 = vmatprep.subr.mxu0 0.0
    %230 = vmatpush2.msra.mxu0 0.0
    %231 = vmatprep.subr.mxu0 0.0
    %232 = vmatpush2.msra.mxu0 0.0
    %233 = vmatprep.subr.mxu0 0.0
    %234 = vmatpush2.msra.mxu0 0.0
    %235 = vmatprep.subr.mxu0 0.0
    %236 = vmatpush2.msra.mxu0 0.0
    %237 = vmatprep.subr.mxu0 0.0
    %238 = vmatpush2.msra.mxu0 0.0
    %239 = vmatprep.subr.mxu0 0.0
    %240 = vmatpush2.msra.mxu0 0.0
    %241 = vmatprep.subr.mxu0 0.0
    %242 = vmatpush2.msra.mxu0 0.0
    %243 = vmatprep.subr.mxu0 0.0
    %244 = vmatpush2.msra.mxu0 0.0
    %245 = vmatprep.subr.mxu0 0.0
    %246 = vmatpush2.msra.mxu0 0.0
    %247 = vmatprep.subr.mxu0 0.0
    %248 = vmatpush2.msra.mxu0 0.0
    %249 = vmatprep.subr.mxu0 0.0
    %250 = vmatpush2.msra.mxu0 0.0
    %251 = vmatprep.subr.mxu0 0.0
    %252 = vmatpush2.msra.mxu0 0.0
    %253 = vmatprep.subr.mxu0 0.0
    %254 = vmatpush2.msra.mxu0 0.0
    %255 = vmatprep.subr.mxu0 0.0
    %256 = vmatpush2.msra.mxu0 0.0
    %257 = vmatprep.subr.mxu0 0.0
    %258 = vmatpush2.msra.mxu0 0.0
    %259 = vmatprep.mubr.f32.mxu0 0.0
    %260 = vmatmul.mubr.f32.gmra.mxu0 %v193
    %v261 = vpop.f32.mrf.mxu0
    %v262 = vadd.f32 0.0, %v261
    %v263 = vpop.f32.mrf.mxu0
    %264 = vdwg.mxu0
    %v265 = vadd.f32 %v189, %v262
    %v266 = vxor.u32 %v265, 2147483648
    %v267 = vmul.f32 %v266, 1.442695
    %v268 = vpow.pop %v267
    %v269 = vadd.f32 %v268, 1.0
    %v270 = vrcp.pop %v269
    %v271 = vmul.f32 1.0, %v270
    %v272 = vtanh.pop %v265
    %v273 = vmul.f32 %v271, %v180
    %275 = vrot.lane.b32.xlu0 %v272, 32
    %v276 = vpop.permute.xlu0 %275
    %v278 = vmul.f32 %v271, %v276
    %280 = vrot.lane.b32.xlu0 %v278, 32
    %v281 = vpop.permute.xlu0 %280
    %v283 = vadd.f32 %v273, %v281
    %v284 = vtanh.pop %v283
    %286 = vrot.lane.b32.xlu0 %v284, 32
    %v287 = vpop.permute.xlu0 %286
    %v289 = vmul.f32 %v271, %v287
    %s290 = scalar_lea.vmem [#allocation4], 16
    %v291 = vld [vmem:[%s290] sm:$0xff]
    %v292 = vadd.f32 %v291, %v81
    %294 = vrot.lane.b32.xlu0 %v289, 64
    %v295 = vpop.permute.xlu0 %294
    %v296 = vsel %vm84, %v295, 0
    %298 = vmatprep.subr.mxu0 0.0
    %299 = vmatpush1.msra.mxu0 0.0
    %300 = vmatprep.subr.mxu0 0.0
    %301 = vmatpush1.msra.mxu0 0.0
    %302 = vmatprep.subr.mxu0 0.0
    %303 = vmatpush1.msra.mxu0 0.0
    %304 = vmatprep.subr.mxu0 0.0
    %305 = vmatpush1.msra.mxu0 0.0
    %306 = vmatprep.subr.mxu0 0.0
    %307 = vmatpush1.msra.mxu0 0.0
    %308 = vmatprep.subr.mxu0 0.0
    %309 = vmatpush1.msra.mxu0 0.0
    %310 = vmatprep.subr.mxu0 0.0
    %311 = vmatpush1.msra.mxu0 0.0
    %312 = vmatprep.subr.mxu0 0.0
    %313 = vmatpush1.msra.mxu0 0.0
    %314 = vmatprep.subr.mxu0 0.0
    %315 = vmatpush1.msra.mxu0 0.0
    %316 = vmatprep.subr.mxu0 0.0
    %317 = vmatpush1.msra.mxu0 0.0
    %318 = vmatprep.subr.mxu0 0.0
    %319 = vmatpush1.msra.mxu0 0.0
    %320 = vmatprep.subr.mxu0 0.0
    %321 = vmatpush1.msra.mxu0 0.0
    %322 = vmatprep.subr.mxu0 0.0
    %323 = vmatpush1.msra.mxu0 %v72
    %324 = vmatprep.subr.mxu0 0.0
    %325 = vmatpush1.msra.mxu0 %v71
    %326 = vmatprep.subr.mxu0 0.0
    %327 = vmatpush1.msra.mxu0 %v70
    %328 = vmatprep.subr.mxu0 0.0
    %329 = vmatpush1.msra.mxu0 %v69
    %330 = vmatprep.subr.mxu0 0.0
    %331 = vmatpush2.msra.mxu0 0.0
    %332 = vmatprep.subr.mxu0 0.0
    %333 = vmatpush2.msra.mxu0 0.0
    %334 = vmatprep.subr.mxu0 0.0
    %335 = vmatpush2.msra.mxu0 0.0
    %336 = vmatprep.subr.mxu0 0.0
    %337 = vmatpush2.msra.mxu0 0.0
    %338 = vmatprep.subr.mxu0 0.0
    %339 = vmatpush2.msra.mxu0 0.0
    %340 = vmatprep.subr.mxu0 0.0
    %341 = vmatpush2.msra.mxu0 0.0
    %342 = vmatprep.subr.mxu0 0.0
    %343 = vmatpush2.msra.mxu0 0.0
    %344 = vmatprep.subr.mxu0 0.0
    %345 = vmatpush2.msra.mxu0 0.0
    %346 = vmatprep.subr.mxu0 0.0
    %347 = vmatpush2.msra.mxu0 0.0
    %348 = vmatprep.subr.mxu0 0.0
    %349 = vmatpush2.msra.mxu0 0.0
    %350 = vmatprep.subr.mxu0 0.0
    %351 = vmatpush2.msra.mxu0 0.0
    %352 = vmatprep.subr.mxu0 0.0
    %353 = vmatpush2.msra.mxu0 0.0
    %354 = vmatprep.subr.mxu0 0.0
    %355 = vmatpush2.msra.mxu0 0.0
    %356 = vmatprep.subr.mxu0 0.0
    %357 = vmatpush2.msra.mxu0 0.0
    %358 = vmatprep.subr.mxu0 0.0
    %359 = vmatpush2.msra.mxu0 0.0
    %360 = vmatprep.subr.mxu0 0.0
    %361 = vmatpush2.msra.mxu0 0.0
    %362 = vmatprep.mubr.f32.mxu0 0.0
    %363 = vmatmul.mubr.f32.gmra.mxu0 %v296
    %v364 = vpop.f32.mrf.mxu0
    %v365 = vadd.f32 0.0, %v364
    %v366 = vpop.f32.mrf.mxu0
    %367 = vdwg.mxu0
    %v368 = vadd.f32 %v292, %v365
    %v369 = vxor.u32 %v368, 2147483648
    %v370 = vmul.f32 %v369, 1.442695
    %v371 = vpow.pop %v370
    %v372 = vadd.f32 %v371, 1.0
    %v373 = vrcp.pop %v372
    %v374 = vmul.f32 1.0, %v373
    %v375 = vtanh.pop %v368
    %v376 = vmul.f32 %v374, %v283
    %378 = vrot.lane.b32.xlu0 %v375, 32
    %v379 = vpop.permute.xlu0 %378
    %v381 = vmul.f32 %v374, %v379
    %383 = vrot.lane.b32.xlu0 %v381, 32
    %v384 = vpop.permute.xlu0 %383
    %v386 = vadd.f32 %v376, %v384
    %v387 = vtanh.pop %v386
    %389 = vrot.lane.b32.xlu0 %v387, 32
    %v390 = vpop.permute.xlu0 %389
    %v392 = vmul.f32 %v374, %v390
    %s393 = scalar_lea.vmem [#allocation4], 24
    %v394 = vld [vmem:[%s393] sm:$0xff]
    %v395 = vadd.f32 %v394, %v81
    %397 = vrot.lane.b32.xlu0 %v392, 64
    %v398 = vpop.permute.xlu0 %397
    %v399 = vsel %vm84, %v398, 0
    %401 = vmatprep.subr.mxu0 0.0
    %402 = vmatpush1.msra.mxu0 0.0
    %403 = vmatprep.subr.mxu0 0.0
    %404 = vmatpush1.msra.mxu0 0.0
    %405 = vmatprep.subr.mxu0 0.0
    %406 = vmatpush1.msra.mxu0 0.0
    %407 = vmatprep.subr.mxu0 0.0
    %408 = vmatpush1.msra.mxu0 0.0
    %409 = vmatprep.subr.mxu0 0.0
    %410 = vmatpush1.msra.mxu0 0.0
    %411 = vmatprep.subr.mxu0 0.0
    %412 = vmatpush1.msra.mxu0 0.0
    %413 = vmatprep.subr.mxu0 0.0
    %414 = vmatpush1.msra.mxu0 0.0
    %415 = vmatprep.subr.mxu0 0.0
    %416 = vmatpush1.msra.mxu0 0.0
    %417 = vmatprep.subr.mxu0 0.0
    %418 = vmatpush1.msra.mxu0 0.0
    %419 = vmatprep.subr.mxu0 0.0
    %420 = vmatpush1.msra.mxu0 0.0
    %421 = vmatprep.subr.mxu0 0.0
    %422 = vmatpush1.msra.mxu0 0.0
    %423 = vmatprep.subr.mxu0 0.0
    %424 = vmatpush1.msra.mxu0 0.0
    %425 = vmatprep.subr.mxu0 0.0
    %426 = vmatpush1.msra.mxu0 %v72
    %427 = vmatprep.subr.mxu0 0.0
    %428 = vmatpush1.msra.mxu0 %v71
    %429 = vmatprep.subr.mxu0 0.0
    %430 = vmatpush1.msra.mxu0 %v70
    %431 = vmatprep.subr.mxu0 0.0
    %432 = vmatpush1.msra.mxu0 %v69
    %433 = vmatprep.subr.mxu0 0.0
    %434 = vmatpush2.msra.mxu0 0.0
    %435 = vmatprep.subr.mxu0 0.0
    %436 = vmatpush2.msra.mxu0 0.0
    %437 = vmatprep.subr.mxu0 0.0
    %438 = vmatpush2.msra.mxu0 0.0
    %439 = vmatprep.subr.mxu0 0.0
    %440 = vmatpush2.msra.mxu0 0.0
    %441 = vmatprep.subr.mxu0 0.0
    %442 = vmatpush2.msra.mxu0 0.0
    %443 = vmatprep.subr.mxu0 0.0
    %444 = vmatpush2.msra.mxu0 0.0
    %445 = vmatprep.subr.mxu0 0.0
    %446 = vmatpush2.msra.mxu0 0.0
    %447 = vmatprep.subr.mxu0 0.0
    %448 = vmatpush2.msra.mxu0 0.0
    %449 = vmatprep.subr.mxu0 0.0
    %450 = vmatpush2.msra.mxu0 0.0
    %451 = vmatprep.subr.mxu0 0.0
    %452 = vmatpush2.msra.mxu0 0.0
    %453 = vmatprep.subr.mxu0 0.0
    %454 = vmatpush2.msra.mxu0 0.0
    %455 = vmatprep.subr.mxu0 0.0
    %456 = vmatpush2.msra.mxu0 0.0
    %457 = vmatprep.subr.mxu0 0.0
    %458 = vmatpush2.msra.mxu0 0.0
    %459 = vmatprep.subr.mxu0 0.0
    %460 = vmatpush2.msra.mxu0 0.0
    %461 = vmatprep.subr.mxu0 0.0
    %462 = vmatpush2.msra.mxu0 0.0
    %463 = vmatprep.subr.mxu0 0.0
    %464 = vmatpush2.msra.mxu0 0.0
    %465 = vmatprep.mubr.f32.mxu0 0.0
    %466 = vmatmul.mubr.f32.gmra.mxu0 %v399
    %v467 = vpop.f32.mrf.mxu0
    %v468 = vadd.f32 0.0, %v467
    %v469 = vpop.f32.mrf.mxu0
    %470 = vdwg.mxu0
    %v471 = vadd.f32 %v395, %v468
    %v472 = vxor.u32 %v471, 2147483648
    %v473 = vmul.f32 %v472, 1.442695
    %v474 = vpow.pop %v473
    %v475 = vadd.f32 %v474, 1.0
    %v476 = vrcp.pop %v475
    %v477 = vmul.f32 1.0, %v476
    %v478 = vtanh.pop %v471
    %v479 = vmul.f32 %v477, %v386
    %481 = vrot.lane.b32.xlu0 %v478, 32
    %v482 = vpop.permute.xlu0 %481
    %v484 = vmul.f32 %v477, %v482
    %486 = vrot.lane.b32.xlu0 %v484, 32
    %v487 = vpop.permute.xlu0 %486
    %v489 = vadd.f32 %v479, %v487
    %v490 = vtanh.pop %v489
    %492 = vrot.lane.b32.xlu0 %v490, 32
    %v493 = vpop.permute.xlu0 %492
    %v495 = vmul.f32 %v477, %v493
    %s496 = scalar_lea.vmem [#allocation4], 32
    %v497 = vld [vmem:[%s496] sm:$0xff]
    %v498 = vadd.f32 %v497, %v81
    %500 = vrot.lane.b32.xlu0 %v495, 64
    %v501 = vpop.permute.xlu0 %500
    %v502 = vsel %vm84, %v501, 0
    %504 = vmatprep.subr.mxu0 0.0
    %505 = vmatpush1.msra.mxu0 0.0
    %506 = vmatprep.subr.mxu0 0.0
    %507 = vmatpush1.msra.mxu0 0.0
    %508 = vmatprep.subr.mxu0 0.0
    %509 = vmatpush1.msra.mxu0 0.0
    %510 = vmatprep.subr.mxu0 0.0
    %511 = vmatpush1.msra.mxu0 0.0
    %512 = vmatprep.subr.mxu0 0.0
    %513 = vmatpush1.msra.mxu0 0.0
    %514 = vmatprep.subr.mxu0 0.0
    %515 = vmatpush1.msra.mxu0 0.0
    %516 = vmatprep.subr.mxu0 0.0
    %517 = vmatpush1.msra.mxu0 0.0
    %518 = vmatprep.subr.mxu0 0.0
    %519 = vmatpush1.msra.mxu0 0.0
    %520 = vmatprep.subr.mxu0 0.0
    %521 = vmatpush1.msra.mxu0 0.0
    %522 = vmatprep.subr.mxu0 0.0
    %523 = vmatpush1.msra.mxu0 0.0
    %524 = vmatprep.subr.mxu0 0.0
    %525 = vmatpush1.msra.mxu0 0.0
    %526 = vmatprep.subr.mxu0 0.0
    %527 = vmatpush1.msra.mxu0 0.0
    %528 = vmatprep.subr.mxu0 0.0
    %529 = vmatpush1.msra.mxu0 %v72
    %530 = vmatprep.subr.mxu0 0.0
    %531 = vmatpush1.msra.mxu0 %v71
    %532 = vmatprep.subr.mxu0 0.0
    %533 = vmatpush1.msra.mxu0 %v70
    %534 = vmatprep.subr.mxu0 0.0
    %535 = vmatpush1.msra.mxu0 %v69
    %536 = vmatprep.subr.mxu0 0.0
    %537 = vmatpush2.msra.mxu0 0.0
    %538 = vmatprep.subr.mxu0 0.0
    %539 = vmatpush2.msra.mxu0 0.0
    %540 = vmatprep.subr.mxu0 0.0
    %541 = vmatpush2.msra.mxu0 0.0
    %542 = vmatprep.subr.mxu0 0.0
    %543 = vmatpush2.msra.mxu0 0.0
    %544 = vmatprep.subr.mxu0 0.0
    %545 = vmatpush2.msra.mxu0 0.0
    %546 = vmatprep.subr.mxu0 0.0
    %547 = vmatpush2.msra.mxu0 0.0
    %548 = vmatprep.subr.mxu0 0.0
    %549 = vmatpush2.msra.mxu0 0.0
    %550 = vmatprep.subr.mxu0 0.0
    %551 = vmatpush2.msra.mxu0 0.0
    %552 = vmatprep.subr.mxu0 0.0
    %553 = vmatpush2.msra.mxu0 0.0
    %554 = vmatprep.subr.mxu0 0.0
    %555 = vmatpush2.msra.mxu0 0.0
    %556 = vmatprep.subr.mxu0 0.0
    %557 = vmatpush2.msra.mxu0 0.0
    %558 = vmatprep.subr.mxu0 0.0
    %559 = vmatpush2.msra.mxu0 0.0
    %560 = vmatprep.subr.mxu0 0.0
    %561 = vmatpush2.msra.mxu0 0.0
    %562 = vmatprep.subr.mxu0 0.0
    %563 = vmatpush2.msra.mxu0 0.0
    %564 = vmatprep.subr.mxu0 0.0
    %565 = vmatpush2.msra.mxu0 0.0
    %566 = vmatprep.subr.mxu0 0.0
    %567 = vmatpush2.msra.mxu0 0.0
    %568 = vmatprep.mubr.f32.mxu0 0.0
    %569 = vmatmul.mubr.f32.gmra.mxu0 %v502
    %v570 = vpop.f32.mrf.mxu0
    %v571 = vadd.f32 0.0, %v570
    %v572 = vpop.f32.mrf.mxu0
    %573 = vdwg.mxu0
    %v574 = vadd.f32 %v498, %v571
    %v575 = vxor.u32 %v574, 2147483648
    %v576 = vmul.f32 %v575, 1.442695
    %v577 = vpow.pop %v576
    %v578 = vadd.f32 %v577, 1.0
    %v579 = vrcp.pop %v578
    %v580 = vmul.f32 1.0, %v579
    %v581 = vtanh.pop %v574
    %v582 = vmul.f32 %v580, %v489
    %584 = vrot.lane.b32.xlu0 %v581, 32
    %v585 = vpop.permute.xlu0 %584
    %v587 = vmul.f32 %v580, %v585
    %589 = vrot.lane.b32.xlu0 %v587, 32
    %v590 = vpop.permute.xlu0 %589
    %v592 = vadd.f32 %v582, %v590
    %v593 = vtanh.pop %v592
    %595 = vrot.lane.b32.xlu0 %v593, 32
    %v596 = vpop.permute.xlu0 %595
    %v598 = vmul.f32 %v580, %v596
    %s599 = scalar_lea.vmem [#allocation4], 40
    %v600 = vld [vmem:[%s599] sm:$0xff]
    %v601 = vadd.f32 %v600, %v81
    %603 = vrot.lane.b32.xlu0 %v598, 64
    %v604 = vpop.permute.xlu0 %603
    %v605 = vsel %vm84, %v604, 0
    %607 = vmatprep.subr.mxu0 0.0
    %608 = vmatpush1.msra.mxu0 0.0
    %609 = vmatprep.subr.mxu0 0.0
    %610 = vmatpush1.msra.mxu0 0.0
    %611 = vmatprep.subr.mxu0 0.0
    %612 = vmatpush1.msra.mxu0 0.0
    %613 = vmatprep.subr.mxu0 0.0
    %614 = vmatpush1.msra.mxu0 0.0
    %615 = vmatprep.subr.mxu0 0.0
    %616 = vmatpush1.msra.mxu0 0.0
    %617 = vmatprep.subr.mxu0 0.0
    %618 = vmatpush1.msra.mxu0 0.0
    %619 = vmatprep.subr.mxu0 0.0
    %620 = vmatpush1.msra.mxu0 0.0
    %621 = vmatprep.subr.mxu0 0.0
    %622 = vmatpush1.msra.mxu0 0.0
    %623 = vmatprep.subr.mxu0 0.0
    %624 = vmatpush1.msra.mxu0 0.0
    %625 = vmatprep.subr.mxu0 0.0
    %626 = vmatpush1.msra.mxu0 0.0
    %627 = vmatprep.subr.mxu0 0.0
    %628 = vmatpush1.msra.mxu0 0.0
    %629 = vmatprep.subr.mxu0 0.0
    %630 = vmatpush1.msra.mxu0 0.0
    %631 = vmatprep.subr.mxu0 0.0
    %632 = vmatpush1.msra.mxu0 %v72
    %633 = vmatprep.subr.mxu0 0.0
    %634 = vmatpush1.msra.mxu0 %v71
    %635 = vmatprep.subr.mxu0 0.0
    %636 = vmatpush1.msra.mxu0 %v70
    %637 = vmatprep.subr.mxu0 0.0
    %638 = vmatpush1.msra.mxu0 %v69
    %639 = vmatprep.subr.mxu0 0.0
    %640 = vmatpush2.msra.mxu0 0.0
    %641 = vmatprep.subr.mxu0 0.0
    %642 = vmatpush2.msra.mxu0 0.0
    %643 = vmatprep.subr.mxu0 0.0
    %644 = vmatpush2.msra.mxu0 0.0
    %645 = vmatprep.subr.mxu0 0.0
    %646 = vmatpush2.msra.mxu0 0.0
    %647 = vmatprep.subr.mxu0 0.0
    %648 = vmatpush2.msra.mxu0 0.0
    %649 = vmatprep.subr.mxu0 0.0
    %650 = vmatpush2.msra.mxu0 0.0
    %651 = vmatprep.subr.mxu0 0.0
    %652 = vmatpush2.msra.mxu0 0.0
    %653 = vmatprep.subr.mxu0 0.0
    %654 = vmatpush2.msra.mxu0 0.0
    %655 = vmatprep.subr.mxu0 0.0
    %656 = vmatpush2.msra.mxu0 0.0
    %657 = vmatprep.subr.mxu0 0.0
    %658 = vmatpush2.msra.mxu0 0.0
    %659 = vmatprep.subr.mxu0 0.0
    %660 = vmatpush2.msra.mxu0 0.0
    %661 = vmatprep.subr.mxu0 0.0
    %662 = vmatpush2.msra.mxu0 0.0
    %663 = vmatprep.subr.mxu0 0.0
    %664 = vmatpush2.msra.mxu0 0.0
    %665 = vmatprep.subr.mxu0 0.0
    %666 = vmatpush2.msra.mxu0 0.0
    %667 = vmatprep.subr.mxu0 0.0
    %668 = vmatpush2.msra.mxu0 0.0
    %669 = vmatprep.subr.mxu0 0.0
    %670 = vmatpush2.msra.mxu0 0.0
    %671 = vmatprep.mubr.f32.mxu0 0.0
    %672 = vmatmul.mubr.f32.gmra.mxu0 %v605
    %v673 = vpop.f32.mrf.mxu0
    %v674 = vadd.f32 0.0, %v673
    %v675 = vpop.f32.mrf.mxu0
    %676 = vdwg.mxu0
    %v677 = vadd.f32 %v601, %v674
    %v678 = vxor.u32 %v677, 2147483648
    %v679 = vmul.f32 %v678, 1.442695
    %v680 = vpow.pop %v679
    %v681 = vadd.f32 %v680, 1.0
    %v682 = vrcp.pop %v681
    %v683 = vmul.f32 1.0, %v682
    %v684 = vtanh.pop %v677
    %v685 = vmul.f32 %v683, %v592
    %687 = vrot.lane.b32.xlu0 %v684, 32
    %v688 = vpop.permute.xlu0 %687
    %v690 = vmul.f32 %v683, %v688
    %692 = vrot.lane.b32.xlu0 %v690, 32
    %v693 = vpop.permute.xlu0 %692
    %v695 = vadd.f32 %v685, %v693
    %v696 = vtanh.pop %v695
    %698 = vrot.lane.b32.xlu0 %v696, 32
    %v699 = vpop.permute.xlu0 %698
    %v701 = vmul.f32 %v683, %v699
    %s702 = scalar_lea.vmem [#allocation4], 48
    %v703 = vld [vmem:[%s702] sm:$0xff]
    %v704 = vadd.f32 %v703, %v81
    %706 = vrot.lane.b32.xlu0 %v701, 64
    %v707 = vpop.permute.xlu0 %706
    %v708 = vsel %vm84, %v707, 0
    %710 = vmatprep.subr.mxu0 0.0
    %711 = vmatpush1.msra.mxu0 0.0
    %712 = vmatprep.subr.mxu0 0.0
    %713 = vmatpush1.msra.mxu0 0.0
    %714 = vmatprep.subr.mxu0 0.0
    %715 = vmatpush1.msra.mxu0 0.0
    %716 = vmatprep.subr.mxu0 0.0
    %717 = vmatpush1.msra.mxu0 0.0
    %718 = vmatprep.subr.mxu0 0.0
    %719 = vmatpush1.msra.mxu0 0.0
    %720 = vmatprep.subr.mxu0 0.0
    %721 = vmatpush1.msra.mxu0 0.0
    %722 = vmatprep.subr.mxu0 0.0
    %723 = vmatpush1.msra.mxu0 0.0
    %724 = vmatprep.subr.mxu0 0.0
    %725 = vmatpush1.msra.mxu0 0.0
    %726 = vmatprep.subr.mxu0 0.0
    %727 = vmatpush1.msra.mxu0 0.0
    %728 = vmatprep.subr.mxu0 0.0
    %729 = vmatpush1.msra.mxu0 0.0
    %730 = vmatprep.subr.mxu0 0.0
    %731 = vmatpush1.msra.mxu0 0.0
    %732 = vmatprep.subr.mxu0 0.0
    %733 = vmatpush1.msra.mxu0 0.0
    %734 = vmatprep.subr.mxu0 0.0
    %735 = vmatpush1.msra.mxu0 %v72
    %736 = vmatprep.subr.mxu0 0.0
    %737 = vmatpush1.msra.mxu0 %v71
    %738 = vmatprep.subr.mxu0 0.0
    %739 = vmatpush1.msra.mxu0 %v70
    %740 = vmatprep.subr.mxu0 0.0
    %741 = vmatpush1.msra.mxu0 %v69
    %742 = vmatprep.subr.mxu0 0.0
    %743 = vmatpush2.msra.mxu0 0.0
    %744 = vmatprep.subr.mxu0 0.0
    %745 = vmatpush2.msra.mxu0 0.0
    %746 = vmatprep.subr.mxu0 0.0
    %747 = vmatpush2.msra.mxu0 0.0
    %748 = vmatprep.subr.mxu0 0.0
    %749 = vmatpush2.msra.mxu0 0.0
    %750 = vmatprep.subr.mxu0 0.0
    %751 = vmatpush2.msra.mxu0 0.0
    %752 = vmatprep.subr.mxu0 0.0
    %753 = vmatpush2.msra.mxu0 0.0
    %754 = vmatprep.subr.mxu0 0.0
    %755 = vmatpush2.msra.mxu0 0.0
    %756 = vmatprep.subr.mxu0 0.0
    %757 = vmatpush2.msra.mxu0 0.0
    %758 = vmatprep.subr.mxu0 0.0
    %759 = vmatpush2.msra.mxu0 0.0
    %760 = vmatprep.subr.mxu0 0.0
    %761 = vmatpush2.msra.mxu0 0.0
    %762 = vmatprep.subr.mxu0 0.0
    %763 = vmatpush2.msra.mxu0 0.0
    %764 = vmatprep.subr.mxu0 0.0
    %765 = vmatpush2.msra.mxu0 0.0
    %766 = vmatprep.subr.mxu0 0.0
    %767 = vmatpush2.msra.mxu0 0.0
    %768 = vmatprep.subr.mxu0 0.0
    %769 = vmatpush2.msra.mxu0 0.0
    %770 = vmatprep.subr.mxu0 0.0
    %771 = vmatpush2.msra.mxu0 0.0
    %772 = vmatprep.subr.mxu0 0.0
    %773 = vmatpush2.msra.mxu0 0.0
    %774 = vmatprep.mubr.f32.mxu0 0.0
    %775 = vmatmul.mubr.f32.gmra.mxu0 %v708
    %v776 = vpop.f32.mrf.mxu0
    %v777 = vadd.f32 0.0, %v776
    %v778 = vpop.f32.mrf.mxu0
    %779 = vdwg.mxu0
    %v780 = vadd.f32 %v704, %v777
    %v781 = vxor.u32 %v780, 2147483648
    %v782 = vmul.f32 %v781, 1.442695
    %v783 = vpow.pop %v782
    %v784 = vadd.f32 %v783, 1.0
    %v785 = vrcp.pop %v784
    %v786 = vmul.f32 1.0, %v785
    %v787 = vtanh.pop %v780
    %v788 = vmul.f32 %v786, %v695
    %790 = vrot.lane.b32.xlu0 %v787, 32
    %v791 = vpop.permute.xlu0 %790
    %v793 = vmul.f32 %v786, %v791
    %795 = vrot.lane.b32.xlu0 %v793, 32
    %v796 = vpop.permute.xlu0 %795
    %v798 = vadd.f32 %v788, %v796
    %v799 = vtanh.pop %v798
    %801 = vrot.lane.b32.xlu0 %v799, 32
    %v802 = vpop.permute.xlu0 %801
    %v804 = vmul.f32 %v786, %v802
    %s805 = scalar_lea.vmem [#allocation4], 56
    %v806 = vld [vmem:[%s805] sm:$0xff]
    %v807 = vadd.f32 %v806, %v81
    %809 = vrot.lane.b32.xlu0 %v804, 64
    %v810 = vpop.permute.xlu0 %809
    %v811 = vsel %vm84, %v810, 0
    %813 = vmatprep.subr.mxu0 0.0
    %814 = vmatpush1.msra.mxu0 0.0
    %815 = vmatprep.subr.mxu0 0.0
    %816 = vmatpush1.msra.mxu0 0.0
    %817 = vmatprep.subr.mxu0 0.0
    %818 = vmatpush1.msra.mxu0 0.0
    %819 = vmatprep.subr.mxu0 0.0
    %820 = vmatpush1.msra.mxu0 0.0
    %821 = vmatprep.subr.mxu0 0.0
    %822 = vmatpush1.msra.mxu0 0.0
    %823 = vmatprep.subr.mxu0 0.0
    %824 = vmatpush1.msra.mxu0 0.0
    %825 = vmatprep.subr.mxu0 0.0
    %826 = vmatpush1.msra.mxu0 0.0
    %827 = vmatprep.subr.mxu0 0.0
    %828 = vmatpush1.msra.mxu0 0.0
    %829 = vmatprep.subr.mxu0 0.0
    %830 = vmatpush1.msra.mxu0 0.0
    %831 = vmatprep.subr.mxu0 0.0
    %832 = vmatpush1.msra.mxu0 0.0
    %833 = vmatprep.subr.mxu0 0.0
    %834 = vmatpush1.msra.mxu0 0.0
    %835 = vmatprep.subr.mxu0 0.0
    %836 = vmatpush1.msra.mxu0 0.0
    %837 = vmatprep.subr.mxu0 0.0
    %838 = vmatpush1.msra.mxu0 %v72
    %839 = vmatprep.subr.mxu0 0.0
    %840 = vmatpush1.msra.mxu0 %v71
    %841 = vmatprep.subr.mxu0 0.0
    %842 = vmatpush1.msra.mxu0 %v70
    %843 = vmatprep.subr.mxu0 0.0
    %844 = vmatpush1.msra.mxu0 %v69
    %845 = vmatprep.subr.mxu0 0.0
    %846 = vmatpush2.msra.mxu0 0.0
    %847 = vmatprep.subr.mxu0 0.0
    %848 = vmatpush2.msra.mxu0 0.0
    %849 = vmatprep.subr.mxu0 0.0
    %850 = vmatpush2.msra.mxu0 0.0
    %851 = vmatprep.subr.mxu0 0.0
    %852 = vmatpush2.msra.mxu0 0.0
    %853 = vmatprep.subr.mxu0 0.0
    %854 = vmatpush2.msra.mxu0 0.0
    %855 = vmatprep.subr.mxu0 0.0
    %856 = vmatpush2.msra.mxu0 0.0
    %857 = vmatprep.subr.mxu0 0.0
    %858 = vmatpush2.msra.mxu0 0.0
    %859 = vmatprep.subr.mxu0 0.0
    %860 = vmatpush2.msra.mxu0 0.0
    %861 = vmatprep.subr.mxu0 0.0
    %862 = vmatpush2.msra.mxu0 0.0
    %863 = vmatprep.subr.mxu0 0.0
    %864 = vmatpush2.msra.mxu0 0.0
    %865 = vmatprep.subr.mxu0 0.0
    %866 = vmatpush2.msra.mxu0 0.0
    %867 = vmatprep.subr.mxu0 0.0
    %868 = vmatpush2.msra.mxu0 0.0
    %869 = vmatprep.subr.mxu0 0.0
    %870 = vmatpush2.msra.mxu0 0.0
    %871 = vmatprep.subr.mxu0 0.0
    %872 = vmatpush2.msra.mxu0 0.0
    %873 = vmatprep.subr.mxu0 0.0
    %874 = vmatpush2.msra.mxu0 0.0
    %875 = vmatprep.subr.mxu0 0.0
    %876 = vmatpush2.msra.mxu0 0.0
    %877 = vmatprep.mubr.f32.mxu0 0.0
    %878 = vmatmul.mubr.f32.gmra.mxu0 %v811
    %v879 = vpop.f32.mrf.mxu0
    %v880 = vadd.f32 0.0, %v879
    %v881 = vpop.f32.mrf.mxu0
    %882 = vdwg.mxu0
    %v883 = vadd.f32 %v807, %v880
    %v884 = vxor.u32 %v883, 2147483648
    %v885 = vmul.f32 %v884, 1.442695
    %v886 = vpow.pop %v885
    %v887 = vadd.f32 %v886, 1.0
    %v888 = vrcp.pop %v887
    %v889 = vmul.f32 1.0, %v888
    %v890 = vtanh.pop %v883
    %v891 = vmul.f32 %v889, %v798
    %893 = vrot.lane.b32.xlu0 %v890, 32
    %v894 = vpop.permute.xlu0 %893
    %v896 = vmul.f32 %v889, %v894
    %898 = vrot.lane.b32.xlu0 %v896, 32
    %v899 = vpop.permute.xlu0 %898
    %v901 = vadd.f32 %v891, %v899
    %v902 = vtanh.pop %v901
    %904 = vrot.lane.b32.xlu0 %v902, 32
    %v905 = vpop.permute.xlu0 %904
    %v907 = vmul.f32 %v889, %v905
    %909 = vrot.lane.b32.xlu0 %v907, 64
    %v910 = vpop.permute.xlu0 %909
    %912 = vst.msk [vmem:[#allocation2] sm:$0xff] %vm84, %v910
    %914 = vrot.lane.b32.xlu0 %v901, 96
    %v915 = vpop.permute.xlu0 %914
    %917 = vst.msk [vmem:[#allocation3] sm:$0xff] %vm84, %v915
    // Predicated region
    $region38: #{tpu_custom_call.1} parent=1 // pred_check
      %p918 = pneg %p62
    $region39: #{tpu_custom_call.1} parent=1 // pred_check_branch
      %920 = sbr.rel (%p918) target = $region41
    $region40: #{tpu_custom_call.1} parent=1 // pred_region
      %v921 = vld [vmem:[#allocation2] sm:$0xff]
      %v922 = vld [vmem:[#allocation9] sm:$0xff]
      %v923 = vld [vmem:[#allocation9 + $0x8] sm:$0xff]
      %v924 = vld [vmem:[#allocation9 + $0x10] sm:$0xff]
      %v925 = vld [vmem:[#allocation9 + $0x18] sm:$0xff]
      %v926 = vld [vmem:[%s4] sm:$0x1]
      %v928 = vlaneseq
      %v929 = vshrl.u32 %v928, 7
      %v930 = vsub.s32 0, %v929
      %v931 = vrot.slane %v926, %v930
      %v934 = vsel %vm84, %v921, 0
      %936 = vmatprep.subr.mxu0 0.0
      %937 = vmatpush1.msra.mxu0 0.0
      %938 = vmatprep.subr.mxu0 0.0
      %939 = vmatpush1.msra.mxu0 0.0
      %940 = vmatprep.subr.mxu0 0.0
      %941 = vmatpush1.msra.mxu0 0.0
      %942 = vmatprep.subr.mxu0 0.0
      %943 = vmatpush1.msra.mxu0 0.0
      %944 = vmatprep.subr.mxu0 0.0
      %945 = vmatpush1.msra.mxu0 0.0
      %946 = vmatprep.subr.mxu0 0.0
      %947 = vmatpush1.msra.mxu0 0.0
      %948 = vmatprep.subr.mxu0 0.0
      %949 = vmatpush1.msra.mxu0 0.0
      %950 = vmatprep.subr.mxu0 0.0
      %951 = vmatpush1.msra.mxu0 0.0
      %952 = vmatprep.subr.mxu0 0.0
      %953 = vmatpush1.msra.mxu0 0.0
      %954 = vmatprep.subr.mxu0 0.0
      %955 = vmatpush1.msra.mxu0 0.0
      %956 = vmatprep.subr.mxu0 0.0
      %957 = vmatpush1.msra.mxu0 0.0
      %958 = vmatprep.subr.mxu0 0.0
      %959 = vmatpush1.msra.mxu0 0.0
      %960 = vmatprep.subr.mxu0 0.0
      %961 = vmatpush1.msra.mxu0 %v925
      %962 = vmatprep.subr.mxu0 0.0
      %963 = vmatpush1.msra.mxu0 %v924
      %964 = vmatprep.subr.mxu0 0.0
      %965 = vmatpush1.msra.mxu0 %v923
      %966 = vmatprep.subr.mxu0 0.0
      %967 = vmatpush1.msra.mxu0 %v922
      %968 = vmatprep.subr.mxu0 0.0
      %969 = vmatpush2.msra.mxu0 0.0
      %970 = vmatprep.subr.mxu0 0.0
      %971 = vmatpush2.msra.mxu0 0.0
      %972 = vmatprep.subr.mxu0 0.0
      %973 = vmatpush2.msra.mxu0 0.0
      %974 = vmatprep.subr.mxu0 0.0
      %975 = vmatpush2.msra.mxu0 0.0
      %976 = vmatprep.subr.mxu0 0.0
      %977 = vmatpush2.msra.mxu0 0.0
      %978 = vmatprep.subr.mxu0 0.0
      %979 = vmatpush2.msra.mxu0 0.0
      %980 = vmatprep.subr.mxu0 0.0
      %981 = vmatpush2.msra.mxu0 0.0
      %982 = vmatprep.subr.mxu0 0.0
      %983 = vmatpush2.msra.mxu0 0.0
      %984 = vmatprep.subr.mxu0 0.0
      %985 = vmatpush2.msra.mxu0 0.0
      %986 = vmatprep.subr.mxu0 0.0
      %987 = vmatpush2.msra.mxu0 0.0
      %988 = vmatprep.subr.mxu0 0.0
      %989 = vmatpush2.msra.mxu0 0.0
      %990 = vmatprep.subr.mxu0 0.0
      %991 = vmatpush2.msra.mxu0 0.0
      %992 = vmatprep.subr.mxu0 0.0
      %993 = vmatpush2.msra.mxu0 0.0
      %994 = vmatprep.subr.mxu0 0.0
      %995 = vmatpush2.msra.mxu0 0.0
      %996 = vmatprep.subr.mxu0 0.0
      %997 = vmatpush2.msra.mxu0 0.0
      %998 = vmatprep.subr.mxu0 0.0
      %999 = vmatpush2.msra.mxu0 0.0
      %1000 = vmatprep.mubr.f32.mxu0 0.0
      %1001 = vmatmul.mubr.f32.gmra.mxu0 %v934
      %v1002 = vpop.f32.mrf.mxu0
      %v1003 = vadd.f32 %v931, %v1002
      %v1004 = vpop.f32.mrf.mxu0
      %1005 = vdwg.mxu0
      %1006 = vst [vmem:[#allocation10] sm:$0xff] %v1003
    $region41: #{tpu_custom_call.1} parent=1 // pred_fallthru
      _
    // Predicated region
    $region42: #{tpu_custom_call.1} parent=1 // pred_check
      _
    $region43: #{tpu_custom_call.1} parent=1 // pred_check_branch
      %1008 = sbr.rel (0) target = $region45
    $region44: #{tpu_custom_call.1} parent=1 // pred_region
      %s1010 = ssub.s32 128, 128
      %1011 = vsyncadd [#allocation6], %s1010
      %s1013 = sshll.u32 [#allocation10], 4
      %s1014 = int_to_ptr.vmem [resolvable:$true] %s1013
      %1016 = dma.vmem_to_hbm [thread:$0]  %s1014, 128, %s5, [#allocation6]
    $region45: #{tpu_custom_call.1} parent=1 // pred_fallthru
      _
    // Predicated region
    $region46: #{tpu_custom_call.1} parent=1 // pred_check
      _
    $region47: #{tpu_custom_call.1} parent=1 // pred_check_branch
      %1018 = sbr.rel (0) target = $region49
    $region48: #{tpu_custom_call.1} parent=1 // pred_region
      %1019 = dma.done [#allocation6], 128
    $region49: #{tpu_custom_call.1} parent=1 // pred_fallthru
      _
    %1020 = vsyncpa [#allocation5], 1
    %1021 = vsyncpa [#allocation8], 1
    %1022 = vsyncpa [#allocation6], 1

</llo_original>
